<compile_context>
chip_gen: v7x
topology: tpu7x:2x2x1
jax: 0.10.0
libtpu: 0.0.40
codegen_flags: <defaults>
</compile_context>

<pallas_src>
import math
from functools import partial

import jax
import jax.numpy as jnp
from jax.experimental import pallas as pl
from jax.experimental.pallas import tpu as pltpu

_LANE = 128


def _round_up(v, m):
    return ((v + m - 1) // m) * m


def _pad_to(a, shape):
    if tuple(a.shape) == tuple(shape):
        return a
    return jnp.pad(a, [(0, t - s) for s, t in zip(a.shape, shape)])


# ----------------------------------------------------------------------------
# Kernel
# ----------------------------------------------------------------------------
def _make_kernel(k, compute_dtype, half, fused_y):
    def mm(a, w):
        # MXU matmul with f32 accumulation; `w` is already in compute_dtype
        # (pre-cast wrapper-side), only the activation is cast here.
        return jnp.dot(a.astype(compute_dtype), w,
                       preferred_element_type=jnp.float32)

    def mlp(base, uw, ub, fw, fb, dw, db):
        # base: activation in compute_dtype (or f32); biases/relu stay f32.
        h = jnp.maximum(mm(base, uw[...]) + ub[...], 0.0)
        if k <= 4:
            for i in range(k):                       # static unroll (k is small)
                h = jnp.maximum(mm(h, fw[i]) + fb[i], 0.0)
        else:
            # Bounded live ranges for deep stacks; dynamic index into the
            # stacked (k, h, h) weight ref.
            def body(i, hh):
                return jnp.maximum(mm(hh, fw[i]) + fb[i], 0.0)
            h = jax.lax.fori_loop(0, k, body, h, unroll=True)
        return mm(h, dw[...]) + db[...]

    def kernel(x0_ref, x1_ref, *refs):
        w = refs[:18]
        outs = refs[18:]
        t1b, t1m, t2b = w[0:6], w[6:12], w[12:18]

        x0 = x0_ref[...]
        x1 = x1_ref[...]
        x0c = x0.astype(compute_dtype)       # single cast, reused by both t1 paths

        # ---- t1 (mult=True): y1 = exp(m1) * x1 + b1 ------------------------
        b1 = mlp(x0c, *t1b)
        m1 = mlp(x0c, *t1m)
        y1 = jnp.exp(m1) * x1.astype(jnp.float32) + b1     # f32 epilogue (EUP + VPU)

        # ---- t2 (mult=False): y0 = x0 + b2 ----------------------------------
        b2 = mlp(y1.astype(compute_dtype), *t2b)
        y0 = x0.astype(jnp.float32) + b2

        # log-det: t2 contributes 0, so total = sum(m1) per row
        # (padded lanes of m1 are exactly 0, so they do not perturb the sum).
        l = jnp.sum(m1, axis=1, keepdims=True)

        if fused_y:
            # half is a multiple of 128 here -> unmasked lane-aligned stores.
            y_ref, l_ref = outs
            y_ref[:, :half] = y0.astype(y_ref.dtype)
            y_ref[:, half:] = y1.astype(y_ref.dtype)
        else:
            y0_ref, y1_ref, l_ref = outs
            y0_ref[...] = y0.astype(y0_ref.dtype)
            y1_ref[...] = y1.astype(y1_ref.dtype)
        l_ref[...] = l.astype(l_ref.dtype)

    return kernel


# ----------------------------------------------------------------------------
# Parameter preparation (wrapper-side layout plumbing: pad + pre-cast, free)
# ----------------------------------------------------------------------------
def _prep_path(path, start_p, end_p, compute_dtype):
    """Pad one transformerFC path (6 arrays) to lane-aligned shapes and pre-cast
    the weights to the MXU compute dtype. Biases stay f32 (f32 epilogue)."""
    uw, ub, fw, fb, dw, db = path
    hidden_p = _round_up(uw.shape[1], _LANE)
    uw = _pad_to(uw, (start_p, hidden_p)).astype(compute_dtype)
    ub = _pad_to(ub, (1, hidden_p)).astype(jnp.float32)
    fw = _pad_to(fw, (fw.shape[0], hidden_p, hidden_p)).astype(compute_dtype)
    fb = _pad_to(fb, (fb.shape[0], 1, hidden_p)).astype(jnp.float32)
    dw = _pad_to(dw, (hidden_p, end_p)).astype(compute_dtype)
    db = _pad_to(db, (1, end_p)).astype(jnp.float32)
    return [uw, ub, fw, fb, dw, db]


def prepare_affine_halves_params(params, half_p, end1_p, compute_dtype):
    """Flat 18-param list [t1_b(6), t1_m(6), t2_b(6)] -> padded/cast kernel arrays."""
    t1b, t1m, t2b = params[0:6], params[6:12], params[12:18]
    return (_prep_path(t1b, half_p, end1_p, compute_dtype)
            + _prep_path(t1m, half_p, end1_p, compute_dtype)
            + _prep_path(t2b, end1_p, half_p, compute_dtype))


# ----------------------------------------------------------------------------
# Wrapper
# ----------------------------------------------------------------------------
def affine_halves_forward(x, params, k, *, tile_m=512, compute_dtype=jnp.bfloat16):
    """x: (batch, n). params: flat list of 18 arrays [t1_b(6), t1_m(6), t2_b(6)];
    weights stored pre-transposed as (in, out), biases as (1, out)."""
    s, n = x.shape
    half = n // 2
    end1 = n - half
    half_p = _round_up(half, _LANE)
    end1_p = _round_up(end1, _LANE)
    fused_y = (half_p == half) and (end1_p == end1)   # single lane-dense y output

    prepped = prepare_affine_halves_params(params, half_p, end1_p, compute_dtype)
    hp = [prepped[0].shape[1], prepped[6].shape[1], prepped[12].shape[1]]
    hmax = max(hp)

    x_item = jnp.dtype(x.dtype).itemsize
    w_bytes = sum(int(p.size) * jnp.dtype(p.dtype).itemsize for p in prepped)

    # --- batch tile ----------------------------------------------------------
    # Sublane packing: 8 rows/vreg for 32-bit, 16 for 16-bit, 32 for 8-bit.
    sub = {4: 8, 2: 16, 1: 32}.get(x_item, 8)
    s_sub = _round_up(s, sub)
    tm = min(_round_up(tile_m, sub), s_sub)

    # Generation-aware VMEM budget (128 MiB on v5e/v6e, 64 MiB on v7x).
    try:
        vmem_cap = int(pltpu.get_tpu_info().vmem_capacity_bytes)
    except Exception:
        vmem_cap = 64 << 20                       # v7x-safe fallback
    cap = max(32 << 20, vmem_cap - (12 << 20))    # leave compiler headroom

    out_row_bytes = (n if fused_y else (half_p + end1_p)) * x_item + 4
    in_row_bytes = (half_p + end1_p) * x_item

    def vmem_need(tm_):
        io = 2 * tm_ * (in_row_bytes + out_row_bytes)          # double-buffered act tiles
        act = 4 * tm_ * (2 * hmax + half_p + 2 * end1_p) * 4   # live f32 intermediates (est.)
        return 2 * w_bytes + io + act + (6 << 20)              # weights are double-buffered

    # Never clamp the limit below the requirement: shrink the batch tile instead.
    while vmem_need(tm) > cap and tm > sub:
        tm = max(sub, _round_up(tm // 2, sub))

    # At least 2 grid steps when the batch allows it (v7x megacore sharding via
    # "parallel" + DMA/compute overlap on single-TC chips).
    if tm >= s_sub and s_sub > sub:
        tm = _round_up((s_sub + 1) // 2, sub)

    s_pad = _round_up(s, tm)
    grid = (s_pad // tm,)
    vmem_limit = int(min(cap, max(vmem_need(tm), 32 << 20)))

    # --- inputs (zero-padded batch rows + lane padding, stripped afterwards) --
    x0 = _pad_to(x[:, :half], (s_pad, half_p))
    x1 = _pad_to(x[:, half:], (s_pad, end1_p))

    def resident(p):
        nd = p.ndim
        return pl.BlockSpec(p.shape, lambda i, _nd=nd: (0,) * _nd)

    in_specs = [
        pl.BlockSpec((tm, half_p), lambda i: (i, 0)),
        pl.BlockSpec((tm, end1_p), lambda i: (i, 0)),
    ] + [resident(p) for p in prepped]

    if fused_y:
        out_shape = (jax.ShapeDtypeStruct((s_pad, n), x.dtype),
                     jax.ShapeDtypeStruct((s_pad, 1), jnp.float32))
        out_specs = (pl.BlockSpec((tm, n), lambda i: (i, 0)),
                     pl.BlockSpec((tm, 1), lambda i: (i, 0)))
    else:
        out_shape = (jax.ShapeDtypeStruct((s_pad, half_p), x.dtype),
                     jax.ShapeDtypeStruct((s_pad, end1_p), x.dtype),
                     jax.ShapeDtypeStruct((s_pad, 1), jnp.float32))
        out_specs = (pl.BlockSpec((tm, half_p), lambda i: (i, 0)),
                     pl.BlockSpec((tm, end1_p), lambda i: (i, 0)),
                     pl.BlockSpec((tm, 1), lambda i: (i, 0)))

    flops_row = (2 * (half_p * hp[0] + k * hp[0] * hp[0] + hp[0] * end1_p)
                 + 2 * (half_p * hp[1] + k * hp[1] * hp[1] + hp[1] * end1_p)
                 + 2 * (end1_p * hp[2] + k * hp[2] * hp[2] + hp[2] * half_p)
                 + 6 * n)
    cost = pl.CostEstimate(
        flops=int(s_pad * flops_row),
        transcendentals=int(s_pad * end1_p),
        bytes_accessed=int(s_pad * (in_row_bytes + out_row_bytes) + w_bytes))

    outs = pl.pallas_call(
        _make_kernel(k, compute_dtype, half, fused_y),
        out_shape=out_shape,
        grid_spec=pltpu.PrefetchScalarGridSpec(
            num_scalar_prefetch=0,
            grid=grid,
            in_specs=in_specs,
            out_specs=out_specs,
        ),
        compiler_params=pltpu.CompilerParams(
            dimension_semantics=("parallel",),
            vmem_limit_bytes=vmem_limit,
        ),
        cost_estimate=cost,
    )(x0, x1, *prepped)

    if fused_y:
        y_full, l = outs
        y = y_full[:s]
    else:
        y0p, y1p, l = outs
        y = jnp.concatenate([y0p[:s, :half], y1p[:s, :end1]], axis=1)
    return y, l[:s, 0]


# ----------------------------------------------------------------------------
# Deterministic parameter construction (mirrors nn.Linear default init and the
# sqrt(end / hidden) rescaling of the "down" layer in transformerFC.__init__).
# Weights are stored pre-transposed: (in, out); biases as (1, out).
# ----------------------------------------------------------------------------
def _linear_init(key, fan_in, fan_out):
    kw, kb = jax.random.split(key)
    bound = 1.0 / math.sqrt(fan_in)
    w = jax.random.uniform(kw, (fan_in, fan_out), jnp.float32, -bound, bound)
    b = jax.random.uniform(kb, (1, fan_out), jnp.float32, -bound, bound)
    return w, b


def _make_path_params(key, start, end, k, hidden):
    keys = jax.random.split(key, k + 2)
    up_w, up_b = _linear_init(keys[0], start, hidden)
    fws, fbs = [], []
    for i in range(k):
        w, b = _linear_init(keys[1 + i], hidden, hidden)
        fws.append(w)
        fbs.append(b)
    dn_w, dn_b = _linear_init(keys[k + 1], hidden, end)
    scale = math.sqrt(float(end) / hidden)
    return [up_w, up_b, jnp.stack(fws), jnp.stack(fbs), dn_w * scale, dn_b * scale]


def make_affine_halves_params(key, n, k, hidden):
    half = n // 2
    k1, k2, k3 = jax.random.split(key, 3)
    t1_b = _make_path_params(k1, half, n - half, k, hidden)   # t1 bias path
    t1_m = _make_path_params(k2, half, n - half, k, hidden)   # t1 mult path
    t2_b = _make_path_params(k3, n - half, half, k, hidden)   # t2 bias path
    return t1_b + t1_m + t2_b


# ----------------------------------------------------------------------------
# Plain-JAX reference (full-precision dots; correctness check vs raw params)
# ----------------------------------------------------------------------------
def _ref_mlp(base, p, k):
    uw, ub, fw, fb, dw, db = p
    hi = jax.lax.Precision.HIGHEST
    h = jnp.maximum(jnp.dot(base, uw, precision=hi) + ub, 0.0)
    for i in range(k):
        h = jnp.maximum(jnp.dot(h, fw[i], precision=hi) + fb[i], 0.0)
    return jnp.dot(h, dw, precision=hi) + db


def _ref_forward(x, params, k, n):
    half = n // 2
    t1_b, t1_m, t2_b = params[0:6], params[6:12], params[12:18]
    x0, x1 = x[:, :half], x[:, half:]
    b1 = _ref_mlp(x0, t1_b, k)
    m1 = _ref_mlp(x0, t1_m, k)
    y1 = jnp.exp(m1) * x1 + b1
    y0 = x0 + _ref_mlp(y1, t2_b, k)
    return jnp.concatenate([y0, y1], axis=1), jnp.sum(m1, axis=1)


# ----------------------------------------------------------------------------
if __name__ == "__main__":
    key = jax.random.PRNGKey(0)

    # --- config 1: tiny, un-aligned feature dims (lane-padding + 2-output path)
    batch, n, k, hidden = 8, 16, 2, 32
    kx, kp, key = jax.random.split(key, 3)
    x = jax.random.normal(kx, (batch, n), dtype=jnp.float32)
    params = make_affine_halves_params(kp, n, k, hidden)
    y_ref, l_ref = _ref_forward(x, params, k, n)

    # f32 MXU path: near-exact vs the reference.
    y32, l32 = jax.jit(partial(affine_halves_forward, k=k,
                               compute_dtype=jnp.float32))(x, params)
    jax.block_until_ready((y32, l32))
    assert y32.shape == (batch, n) and l32.shape == (batch,)
    assert jnp.allclose(y32, y_ref, atol=1e-2, rtol=1e-2)
    assert jnp.allclose(l32, l_ref, atol=1e-2, rtol=1e-2)

    # Default bf16 MXU path (f32 accumulation / epilogue): looser tolerance.
    y16, l16 = jax.jit(partial(affine_halves_forward, k=k))(x, params)
    jax.block_until_ready((y16, l16))
    assert jnp.allclose(y16, y_ref, atol=0.2, rtol=0.1)
    assert jnp.allclose(l16, l_ref, atol=0.3, rtol=0.1)

    # --- config 2: 128-aligned halves (single-y-output path, >=2 grid steps) --
    batch2, n2, k2, hidden2 = 48, 256, 2, 64
    kx2, kp2 = jax.random.split(key)
    x2 = jax.random.normal(kx2, (batch2, n2), dtype=jnp.float32)
    params2 = make_affine_halves_params(kp2, n2, k2, hidden2)
    y2_ref, l2_ref = _ref_forward(x2, params2, k2, n2)

    y2, l2 = jax.jit(partial(affine_halves_forward, k=k2))(x2, params2)
    jax.block_until_ready((y2, l2))
    assert y2.shape == (batch2, n2) and l2.shape == (batch2,)
    assert jnp.allclose(y2, y2_ref, atol=0.5, rtol=0.2)
    assert jnp.allclose(l2, l2_ref, atol=1.5, rtol=0.2)

    # TODO(synk): pushback (inverse) pass not implemented; forward only.
    print("KERNEL_OK")
</pallas_src>

<mosaic_0001>
module attributes {stable_mosaic.version = 11 : i64} {
  func.func @kernel(%arg0: i32, %arg1: memref<8x128xf32, #tpu.memory_space<vmem>>, %arg2: memref<8x128xf32, #tpu.memory_space<vmem>>, %arg3: memref<128x128xf32, #tpu.memory_space<vmem>>, %arg4: memref<1x128xf32, #tpu.memory_space<vmem>>, %arg5: memref<2x128x128xf32, #tpu.memory_space<vmem>>, %arg6: memref<2x1x128xf32, #tpu.memory_space<vmem>>, %arg7: memref<128x128xf32, #tpu.memory_space<vmem>>, %arg8: memref<1x128xf32, #tpu.memory_space<vmem>>, %arg9: memref<128x128xf32, #tpu.memory_space<vmem>>, %arg10: memref<1x128xf32, #tpu.memory_space<vmem>>, %arg11: memref<2x128x128xf32, #tpu.memory_space<vmem>>, %arg12: memref<2x1x128xf32, #tpu.memory_space<vmem>>, %arg13: memref<128x128xf32, #tpu.memory_space<vmem>>, %arg14: memref<1x128xf32, #tpu.memory_space<vmem>>, %arg15: memref<128x128xf32, #tpu.memory_space<vmem>>, %arg16: memref<1x128xf32, #tpu.memory_space<vmem>>, %arg17: memref<2x128x128xf32, #tpu.memory_space<vmem>>, %arg18: memref<2x1x128xf32, #tpu.memory_space<vmem>>, %arg19: memref<128x128xf32, #tpu.memory_space<vmem>>, %arg20: memref<1x128xf32, #tpu.memory_space<vmem>>, %arg21: memref<8x128xf32, #tpu.memory_space<vmem>>, %arg22: memref<8x128xf32, #tpu.memory_space<vmem>>, %arg23: memref<8x1xf32, #tpu.memory_space<vmem>>) attributes {dimension_semantics = [#tpu.dimension_semantics<parallel>], iteration_bounds = array<i64: 1>, scalar_prefetch = 0 : i64, scratch_operands = 0 : i64, tpu.core_type = #tpu.core_type<tc>, window_params = [{transform_indices = @transform_0, window_bounds = array<i64: 8, 128>}, {transform_indices = @transform_1, window_bounds = array<i64: 8, 128>}, {pipeline_mode = #tpu.pipeline_mode<synchronous>, transform_indices = @transform_2, window_bounds = array<i64: 128, 128>}, {pipeline_mode = #tpu.pipeline_mode<synchronous>, transform_indices = @transform_3, window_bounds = array<i64: 1, 128>}, {pipeline_mode = #tpu.pipeline_mode<synchronous>, transform_indices = @transform_4, window_bounds = array<i64: 2, 128, 128>}, {pipeline_mode = #tpu.pipeline_mode<synchronous>, transform_indices = @transform_5, window_bounds = array<i64: 2, 1, 128>}, {pipeline_mode = #tpu.pipeline_mode<synchronous>, transform_indices = @transform_6, window_bounds = array<i64: 128, 128>}, {pipeline_mode = #tpu.pipeline_mode<synchronous>, transform_indices = @transform_7, window_bounds = array<i64: 1, 128>}, {pipeline_mode = #tpu.pipeline_mode<synchronous>, transform_indices = @transform_8, window_bounds = array<i64: 128, 128>}, {pipeline_mode = #tpu.pipeline_mode<synchronous>, transform_indices = @transform_9, window_bounds = array<i64: 1, 128>}, {pipeline_mode = #tpu.pipeline_mode<synchronous>, transform_indices = @transform_10, window_bounds = array<i64: 2, 128, 128>}, {pipeline_mode = #tpu.pipeline_mode<synchronous>, transform_indices = @transform_11, window_bounds = array<i64: 2, 1, 128>}, {pipeline_mode = #tpu.pipeline_mode<synchronous>, transform_indices = @transform_12, window_bounds = array<i64: 128, 128>}, {pipeline_mode = #tpu.pipeline_mode<synchronous>, transform_indices = @transform_13, window_bounds = array<i64: 1, 128>}, {pipeline_mode = #tpu.pipeline_mode<synchronous>, transform_indices = @transform_14, window_bounds = array<i64: 128, 128>}, {pipeline_mode = #tpu.pipeline_mode<synchronous>, transform_indices = @transform_15, window_bounds = array<i64: 1, 128>}, {pipeline_mode = #tpu.pipeline_mode<synchronous>, transform_indices = @transform_16, window_bounds = array<i64: 2, 128, 128>}, {pipeline_mode = #tpu.pipeline_mode<synchronous>, transform_indices = @transform_17, window_bounds = array<i64: 2, 1, 128>}, {pipeline_mode = #tpu.pipeline_mode<synchronous>, transform_indices = @transform_18, window_bounds = array<i64: 128, 128>}, {pipeline_mode = #tpu.pipeline_mode<synchronous>, transform_indices = @transform_19, window_bounds = array<i64: 1, 128>}, {transform_indices = @transform_20, window_bounds = array<i64: 8, 128>}, {transform_indices = @transform_21, window_bounds = array<i64: 8, 128>}, {transform_indices = @transform_22, window_bounds = array<i64: 8, 1>}]} {
    %c0 = arith.constant 0 : index
    %c0_0 = arith.constant 0 : index
    %0 = vector.load %arg1[%c0, %c0_0] : memref<8x128xf32, #tpu.memory_space<vmem>>, vector<8x128xf32>
    %c0_1 = arith.constant 0 : index
    %c0_2 = arith.constant 0 : index
    %1 = vector.load %arg2[%c0_1, %c0_2] : memref<8x128xf32, #tpu.memory_space<vmem>>, vector<8x128xf32>
    %c0_3 = arith.constant 0 : index
    %c0_4 = arith.constant 0 : index
    %2 = vector.load %arg3[%c0_3, %c0_4] : memref<128x128xf32, #tpu.memory_space<vmem>>, vector<128x128xf32>
    %cst = arith.constant dense<0.000000e+00> : vector<8x128xf32>
    %3 = tpu.matmul %0, %2, %cst {dimension_numbers = #tpu.dot_dimension_numbers<[1], [0], [0], [1], [0, 0, 1, 1], [], []>} : vector<8x128xf32>, vector<128x128xf32>, vector<8x128xf32> -> vector<8x128xf32>
    %c0_5 = arith.constant 0 : index
    %c0_6 = arith.constant 0 : index
    %4 = vector.load %arg4[%c0_5, %c0_6] : memref<1x128xf32, #tpu.memory_space<vmem>>, vector<1x128xf32>
    %5 = vector.broadcast %4 : vector<1x128xf32> to vector<8x128xf32>
    %6 = arith.addf %3, %5 : vector<8x128xf32>
    %cst_7 = arith.constant 0.000000e+00 : f32
    %7 = vector.broadcast %cst_7 : f32 to vector<8x128xf32>
    %8 = arith.maximumf %6, %7 : vector<8x128xf32>
    %c0_8 = arith.constant 0 : index
    %c0_9 = arith.constant 0 : index
    %c0_10 = arith.constant 0 : index
    %9 = vector.load %arg5[%c0_8, %c0_9, %c0_10] : memref<2x128x128xf32, #tpu.memory_space<vmem>>, vector<1x128x128xf32>
    %10 = vector.shape_cast %9 : vector<1x128x128xf32> to vector<128x128xf32>
    %cst_11 = arith.constant dense<0.000000e+00> : vector<8x128xf32>
    %11 = tpu.matmul %8, %10, %cst_11 {dimension_numbers = #tpu.dot_dimension_numbers<[1], [0], [0], [1], [0, 0, 1, 1], [], []>} : vector<8x128xf32>, vector<128x128xf32>, vector<8x128xf32> -> vector<8x128xf32>
    %c0_12 = arith.constant 0 : index
    %c0_13 = arith.constant 0 : index
    %c0_14 = arith.constant 0 : index
    %12 = vector.load %arg6[%c0_12, %c0_13, %c0_14] : memref<2x1x128xf32, #tpu.memory_space<vmem>>, vector<1x1x128xf32>
    %13 = vector.shape_cast %12 : vector<1x1x128xf32> to vector<1x128xf32>
    %14 = vector.broadcast %13 : vector<1x128xf32> to vector<8x128xf32>
    %15 = arith.addf %11, %14 : vector<8x128xf32>
    %cst_15 = arith.constant 0.000000e+00 : f32
    %16 = vector.broadcast %cst_15 : f32 to vector<8x128xf32>
    %17 = arith.maximumf %15, %16 : vector<8x128xf32>
    %c1 = arith.constant 1 : index
    %c0_16 = arith.constant 0 : index
    %c0_17 = arith.constant 0 : index
    %18 = vector.load %arg5[%c1, %c0_16, %c0_17] : memref<2x128x128xf32, #tpu.memory_space<vmem>>, vector<1x128x128xf32>
    %19 = vector.shape_cast %18 : vector<1x128x128xf32> to vector<128x128xf32>
    %cst_18 = arith.constant dense<0.000000e+00> : vector<8x128xf32>
    %20 = tpu.matmul %17, %19, %cst_18 {dimension_numbers = #tpu.dot_dimension_numbers<[1], [0], [0], [1], [0, 0, 1, 1], [], []>} : vector<8x128xf32>, vector<128x128xf32>, vector<8x128xf32> -> vector<8x128xf32>
    %c1_19 = arith.constant 1 : index
    %c0_20 = arith.constant 0 : index
    %c0_21 = arith.constant 0 : index
    %21 = vector.load %arg6[%c1_19, %c0_20, %c0_21] : memref<2x1x128xf32, #tpu.memory_space<vmem>>, vector<1x1x128xf32>
    %22 = vector.shape_cast %21 : vector<1x1x128xf32> to vector<1x128xf32>
    %23 = vector.broadcast %22 : vector<1x128xf32> to vector<8x128xf32>
    %24 = arith.addf %20, %23 : vector<8x128xf32>
    %cst_22 = arith.constant 0.000000e+00 : f32
    %25 = vector.broadcast %cst_22 : f32 to vector<8x128xf32>
    %26 = arith.maximumf %24, %25 : vector<8x128xf32>
    %c0_23 = arith.constant 0 : index
    %c0_24 = arith.constant 0 : index
    %27 = vector.load %arg7[%c0_23, %c0_24] : memref<128x128xf32, #tpu.memory_space<vmem>>, vector<128x128xf32>
    %cst_25 = arith.constant dense<0.000000e+00> : vector<8x128xf32>
    %28 = tpu.matmul %26, %27, %cst_25 {dimension_numbers = #tpu.dot_dimension_numbers<[1], [0], [0], [1], [0, 0, 1, 1], [], []>} : vector<8x128xf32>, vector<128x128xf32>, vector<8x128xf32> -> vector<8x128xf32>
    %c0_26 = arith.constant 0 : index
    %c0_27 = arith.constant 0 : index
    %29 = vector.load %arg8[%c0_26, %c0_27] : memref<1x128xf32, #tpu.memory_space<vmem>>, vector<1x128xf32>
    %30 = vector.broadcast %29 : vector<1x128xf32> to vector<8x128xf32>
    %31 = arith.addf %28, %30 : vector<8x128xf32>
    %c0_28 = arith.constant 0 : index
    %c0_29 = arith.constant 0 : index
    %32 = vector.load %arg9[%c0_28, %c0_29] : memref<128x128xf32, #tpu.memory_space<vmem>>, vector<128x128xf32>
    %cst_30 = arith.constant dense<0.000000e+00> : vector<8x128xf32>
    %33 = tpu.matmul %0, %32, %cst_30 {dimension_numbers = #tpu.dot_dimension_numbers<[1], [0], [0], [1], [0, 0, 1, 1], [], []>} : vector<8x128xf32>, vector<128x128xf32>, vector<8x128xf32> -> vector<8x128xf32>
    %c0_31 = arith.constant 0 : index
    %c0_32 = arith.constant 0 : index
    %34 = vector.load %arg10[%c0_31, %c0_32] : memref<1x128xf32, #tpu.memory_space<vmem>>, vector<1x128xf32>
    %35 = vector.broadcast %34 : vector<1x128xf32> to vector<8x128xf32>
    %36 = arith.addf %33, %35 : vector<8x128xf32>
    %cst_33 = arith.constant 0.000000e+00 : f32
    %37 = vector.broadcast %cst_33 : f32 to vector<8x128xf32>
    %38 = arith.maximumf %36, %37 : vector<8x128xf32>
    %c0_34 = arith.constant 0 : index
    %c0_35 = arith.constant 0 : index
    %c0_36 = arith.constant 0 : index
    %39 = vector.load %arg11[%c0_34, %c0_35, %c0_36] : memref<2x128x128xf32, #tpu.memory_space<vmem>>, vector<1x128x128xf32>
    %40 = vector.shape_cast %39 : vector<1x128x128xf32> to vector<128x128xf32>
    %cst_37 = arith.constant dense<0.000000e+00> : vector<8x128xf32>
    %41 = tpu.matmul %38, %40, %cst_37 {dimension_numbers = #tpu.dot_dimension_numbers<[1], [0], [0], [1], [0, 0, 1, 1], [], []>} : vector<8x128xf32>, vector<128x128xf32>, vector<8x128xf32> -> vector<8x128xf32>
    %c0_38 = arith.constant 0 : index
    %c0_39 = arith.constant 0 : index
    %c0_40 = arith.constant 0 : index
    %42 = vector.load %arg12[%c0_38, %c0_39, %c0_40] : memref<2x1x128xf32, #tpu.memory_space<vmem>>, vector<1x1x128xf32>
    %43 = vector.shape_cast %42 : vector<1x1x128xf32> to vector<1x128xf32>
    %44 = vector.broadcast %43 : vector<1x128xf32> to vector<8x128xf32>
    %45 = arith.addf %41, %44 : vector<8x128xf32>
    %cst_41 = arith.constant 0.000000e+00 : f32
    %46 = vector.broadcast %cst_41 : f32 to vector<8x128xf32>
    %47 = arith.maximumf %45, %46 : vector<8x128xf32>
    %c1_42 = arith.constant 1 : index
    %c0_43 = arith.constant 0 : index
    %c0_44 = arith.constant 0 : index
    %48 = vector.load %arg11[%c1_42, %c0_43, %c0_44] : memref<2x128x128xf32, #tpu.memory_space<vmem>>, vector<1x128x128xf32>
    %49 = vector.shape_cast %48 : vector<1x128x128xf32> to vector<128x128xf32>
    %cst_45 = arith.constant dense<0.000000e+00> : vector<8x128xf32>
    %50 = tpu.matmul %47, %49, %cst_45 {dimension_numbers = #tpu.dot_dimension_numbers<[1], [0], [0], [1], [0, 0, 1, 1], [], []>} : vector<8x128xf32>, vector<128x128xf32>, vector<8x128xf32> -> vector<8x128xf32>
    %c1_46 = arith.constant 1 : index
    %c0_47 = arith.constant 0 : index
    %c0_48 = arith.constant 0 : index
    %51 = vector.load %arg12[%c1_46, %c0_47, %c0_48] : memref<2x1x128xf32, #tpu.memory_space<vmem>>, vector<1x1x128xf32>
    %52 = vector.shape_cast %51 : vector<1x1x128xf32> to vector<1x128xf32>
    %53 = vector.broadcast %52 : vector<1x128xf32> to vector<8x128xf32>
    %54 = arith.addf %50, %53 : vector<8x128xf32>
    %cst_49 = arith.constant 0.000000e+00 : f32
    %55 = vector.broadcast %cst_49 : f32 to vector<8x128xf32>
    %56 = arith.maximumf %54, %55 : vector<8x128xf32>
    %c0_50 = arith.constant 0 : index
    %c0_51 = arith.constant 0 : index
    %57 = vector.load %arg13[%c0_50, %c0_51] : memref<128x128xf32, #tpu.memory_space<vmem>>, vector<128x128xf32>
    %cst_52 = arith.constant dense<0.000000e+00> : vector<8x128xf32>
    %58 = tpu.matmul %56, %57, %cst_52 {dimension_numbers = #tpu.dot_dimension_numbers<[1], [0], [0], [1], [0, 0, 1, 1], [], []>} : vector<8x128xf32>, vector<128x128xf32>, vector<8x128xf32> -> vector<8x128xf32>
    %c0_53 = arith.constant 0 : index
    %c0_54 = arith.constant 0 : index
    %59 = vector.load %arg14[%c0_53, %c0_54] : memref<1x128xf32, #tpu.memory_space<vmem>>, vector<1x128xf32>
    %60 = vector.broadcast %59 : vector<1x128xf32> to vector<8x128xf32>
    %61 = arith.addf %58, %60 : vector<8x128xf32>
    %62 = math.exp %61 : vector<8x128xf32>
    %63 = arith.mulf %62, %1 : vector<8x128xf32>
    %64 = arith.addf %63, %31 : vector<8x128xf32>
    %c0_55 = arith.constant 0 : index
    %c0_56 = arith.constant 0 : index
    %65 = vector.load %arg15[%c0_55, %c0_56] : memref<128x128xf32, #tpu.memory_space<vmem>>, vector<128x128xf32>
    %cst_57 = arith.constant dense<0.000000e+00> : vector<8x128xf32>
    %66 = tpu.matmul %64, %65, %cst_57 {dimension_numbers = #tpu.dot_dimension_numbers<[1], [0], [0], [1], [0, 0, 1, 1], [], []>} : vector<8x128xf32>, vector<128x128xf32>, vector<8x128xf32> -> vector<8x128xf32>
    %c0_58 = arith.constant 0 : index
    %c0_59 = arith.constant 0 : index
    %67 = vector.load %arg16[%c0_58, %c0_59] : memref<1x128xf32, #tpu.memory_space<vmem>>, vector<1x128xf32>
    %68 = vector.broadcast %67 : vector<1x128xf32> to vector<8x128xf32>
    %69 = arith.addf %66, %68 : vector<8x128xf32>
    %cst_60 = arith.constant 0.000000e+00 : f32
    %70 = vector.broadcast %cst_60 : f32 to vector<8x128xf32>
    %71 = arith.maximumf %69, %70 : vector<8x128xf32>
    %c0_61 = arith.constant 0 : index
    %c0_62 = arith.constant 0 : index
    %c0_63 = arith.constant 0 : index
    %72 = vector.load %arg17[%c0_61, %c0_62, %c0_63] : memref<2x128x128xf32, #tpu.memory_space<vmem>>, vector<1x128x128xf32>
    %73 = vector.shape_cast %72 : vector<1x128x128xf32> to vector<128x128xf32>
    %cst_64 = arith.constant dense<0.000000e+00> : vector<8x128xf32>
    %74 = tpu.matmul %71, %73, %cst_64 {dimension_numbers = #tpu.dot_dimension_numbers<[1], [0], [0], [1], [0, 0, 1, 1], [], []>} : vector<8x128xf32>, vector<128x128xf32>, vector<8x128xf32> -> vector<8x128xf32>
    %c0_65 = arith.constant 0 : index
    %c0_66 = arith.constant 0 : index
    %c0_67 = arith.constant 0 : index
    %75 = vector.load %arg18[%c0_65, %c0_66, %c0_67] : memref<2x1x128xf32, #tpu.memory_space<vmem>>, vector<1x1x128xf32>
    %76 = vector.shape_cast %75 : vector<1x1x128xf32> to vector<1x128xf32>
    %77 = vector.broadcast %76 : vector<1x128xf32> to vector<8x128xf32>
    %78 = arith.addf %74, %77 : vector<8x128xf32>
    %cst_68 = arith.constant 0.000000e+00 : f32
    %79 = vector.broadcast %cst_68 : f32 to vector<8x128xf32>
    %80 = arith.maximumf %78, %79 : vector<8x128xf32>
    %c1_69 = arith.constant 1 : index
    %c0_70 = arith.constant 0 : index
    %c0_71 = arith.constant 0 : index
    %81 = vector.load %arg17[%c1_69, %c0_70, %c0_71] : memref<2x128x128xf32, #tpu.memory_space<vmem>>, vector<1x128x128xf32>
    %82 = vector.shape_cast %81 : vector<1x128x128xf32> to vector<128x128xf32>
    %cst_72 = arith.constant dense<0.000000e+00> : vector<8x128xf32>
    %83 = tpu.matmul %80, %82, %cst_72 {dimension_numbers = #tpu.dot_dimension_numbers<[1], [0], [0], [1], [0, 0, 1, 1], [], []>} : vector<8x128xf32>, vector<128x128xf32>, vector<8x128xf32> -> vector<8x128xf32>
    %c1_73 = arith.constant 1 : index
    %c0_74 = arith.constant 0 : index
    %c0_75 = arith.constant 0 : index
    %84 = vector.load %arg18[%c1_73, %c0_74, %c0_75] : memref<2x1x128xf32, #tpu.memory_space<vmem>>, vector<1x1x128xf32>
    %85 = vector.shape_cast %84 : vector<1x1x128xf32> to vector<1x128xf32>
    %86 = vector.broadcast %85 : vector<1x128xf32> to vector<8x128xf32>
    %87 = arith.addf %83, %86 : vector<8x128xf32>
    %cst_76 = arith.constant 0.000000e+00 : f32
    %88 = vector.broadcast %cst_76 : f32 to vector<8x128xf32>
    %89 = arith.maximumf %87, %88 : vector<8x128xf32>
    %c0_77 = arith.constant 0 : index
    %c0_78 = arith.constant 0 : index
    %90 = vector.load %arg19[%c0_77, %c0_78] : memref<128x128xf32, #tpu.memory_space<vmem>>, vector<128x128xf32>
    %cst_79 = arith.constant dense<0.000000e+00> : vector<8x128xf32>
    %91 = tpu.matmul %89, %90, %cst_79 {dimension_numbers = #tpu.dot_dimension_numbers<[1], [0], [0], [1], [0, 0, 1, 1], [], []>} : vector<8x128xf32>, vector<128x128xf32>, vector<8x128xf32> -> vector<8x128xf32>
    %c0_80 = arith.constant 0 : index
    %c0_81 = arith.constant 0 : index
    %92 = vector.load %arg20[%c0_80, %c0_81] : memref<1x128xf32, #tpu.memory_space<vmem>>, vector<1x128xf32>
    %93 = vector.broadcast %92 : vector<1x128xf32> to vector<8x128xf32>
    %94 = arith.addf %91, %93 : vector<8x128xf32>
    %95 = arith.addf %0, %94 : vector<8x128xf32>
    %cst_82 = arith.constant dense<0.000000e+00> : vector<8xf32>
    %96 = vector.multi_reduction <add>, %61, %cst_82 [1] : vector<8x128xf32> to vector<8xf32>
    %97 = vector.shape_cast %96 : vector<8xf32> to vector<8x1xf32>
    %c0_83 = arith.constant 0 : index
    %c0_84 = arith.constant 0 : index
    %98 = vector.load %arg21[%c0_83, %c0_84] : memref<8x128xf32, #tpu.memory_space<vmem>>, vector<8x128xf32>
    tpu.vector_store %arg21[%c0_83, %c0_84], %95 {strides = array<i32>} : memref<8x128xf32, #tpu.memory_space<vmem>>, vector<8x128xf32>,
    %c0_85 = arith.constant 0 : index
    %c0_86 = arith.constant 0 : index
    %99 = vector.load %arg22[%c0_85, %c0_86] : memref<8x128xf32, #tpu.memory_space<vmem>>, vector<8x128xf32>
    tpu.vector_store %arg22[%c0_85, %c0_86], %64 {strides = array<i32>} : memref<8x128xf32, #tpu.memory_space<vmem>>, vector<8x128xf32>,
    %c0_87 = arith.constant 0 : index
    %c0_88 = arith.constant 0 : index
    %100 = vector.load %arg23[%c0_87, %c0_88] : memref<8x1xf32, #tpu.memory_space<vmem>>, vector<8x1xf32>
    tpu.vector_store %arg23[%c0_87, %c0_88], %97 {strides = array<i32>} : memref<8x1xf32, #tpu.memory_space<vmem>>, vector<8x1xf32>,
    return
  }
  func.func @transform_0(%arg0: i32) -> (i32, i32) {
    %c0_i32 = arith.constant 0 : i32
    %c0_i32_0 = arith.constant 0 : i32
    return %arg0, %c0_i32 : i32, i32
  }
  func.func @transform_1(%arg0: i32) -> (i32, i32) {
    %c0_i32 = arith.constant 0 : i32
    %c0_i32_0 = arith.constant 0 : i32
    return %arg0, %c0_i32 : i32, i32
  }
  func.func @transform_2(%arg0: i32) -> (i32, i32) {
    %c0_i32 = arith.constant 0 : i32
    %c0_i32_0 = arith.constant 0 : i32
    %c0_i32_1 = arith.constant 0 : i32
    return %c0_i32, %c0_i32_0 : i32, i32
  }
  func.func @transform_3(%arg0: i32) -> (i32, i32) {
    %c0_i32 = arith.constant 0 : i32
    %c0_i32_0 = arith.constant 0 : i32
    %c0_i32_1 = arith.constant 0 : i32
    return %c0_i32, %c0_i32_0 : i32, i32
  }
  func.func @transform_4(%arg0: i32) -> (i32, i32, i32) {
    %c0_i32 = arith.constant 0 : i32
    %c0_i32_0 = arith.constant 0 : i32
    %c0_i32_1 = arith.constant 0 : i32
    %c0_i32_2 = arith.constant 0 : i32
    return %c0_i32, %c0_i32_0, %c0_i32_1 : i32, i32, i32
  }
  func.func @transform_5(%arg0: i32) -> (i32, i32, i32) {
    %c0_i32 = arith.constant 0 : i32
    %c0_i32_0 = arith.constant 0 : i32
    %c0_i32_1 = arith.constant 0 : i32
    %c0_i32_2 = arith.constant 0 : i32
    return %c0_i32, %c0_i32_0, %c0_i32_1 : i32, i32, i32
  }
  func.func @transform_6(%arg0: i32) -> (i32, i32) {
    %c0_i32 = arith.constant 0 : i32
    %c0_i32_0 = arith.constant 0 : i32
    %c0_i32_1 = arith.constant 0 : i32
    return %c0_i32, %c0_i32_0 : i32, i32
  }
  func.func @transform_7(%arg0: i32) -> (i32, i32) {
    %c0_i32 = arith.constant 0 : i32
    %c0_i32_0 = arith.constant 0 : i32
    %c0_i32_1 = arith.constant 0 : i32
    return %c0_i32, %c0_i32_0 : i32, i32
  }
  func.func @transform_8(%arg0: i32) -> (i32, i32) {
    %c0_i32 = arith.constant 0 : i32
    %c0_i32_0 = arith.constant 0 : i32
    %c0_i32_1 = arith.constant 0 : i32
    return %c0_i32, %c0_i32_0 : i32, i32
  }
  func.func @transform_9(%arg0: i32) -> (i32, i32) {
    %c0_i32 = arith.constant 0 : i32
    %c0_i32_0 = arith.constant 0 : i32
    %c0_i32_1 = arith.constant 0 : i32
    return %c0_i32, %c0_i32_0 : i32, i32
  }
  func.func @transform_10(%arg0: i32) -> (i32, i32, i32) {
    %c0_i32 = arith.constant 0 : i32
    %c0_i32_0 = arith.constant 0 : i32
    %c0_i32_1 = arith.constant 0 : i32
    %c0_i32_2 = arith.constant 0 : i32
    return %c0_i32, %c0_i32_0, %c0_i32_1 : i32, i32, i32
  }
  func.func @transform_11(%arg0: i32) -> (i32, i32, i32) {
    %c0_i32 = arith.constant 0 : i32
    %c0_i32_0 = arith.constant 0 : i32
    %c0_i32_1 = arith.constant 0 : i32
    %c0_i32_2 = arith.constant 0 : i32
    return %c0_i32, %c0_i32_0, %c0_i32_1 : i32, i32, i32
  }
  func.func @transform_12(%arg0: i32) -> (i32, i32) {
    %c0_i32 = arith.constant 0 : i32
    %c0_i32_0 = arith.constant 0 : i32
    %c0_i32_1 = arith.constant 0 : i32
    return %c0_i32, %c0_i32_0 : i32, i32
  }
  func.func @transform_13(%arg0: i32) -> (i32, i32) {
    %c0_i32 = arith.constant 0 : i32
    %c0_i32_0 = arith.constant 0 : i32
    %c0_i32_1 = arith.constant 0 : i32
    return %c0_i32, %c0_i32_0 : i32, i32
  }
  func.func @transform_14(%arg0: i32) -> (i32, i32) {
    %c0_i32 = arith.constant 0 : i32
    %c0_i32_0 = arith.constant 0 : i32
    %c0_i32_1 = arith.constant 0 : i32
    return %c0_i32, %c0_i32_0 : i32, i32
  }
  func.func @transform_15(%arg0: i32) -> (i32, i32) {
    %c0_i32 = arith.constant 0 : i32
    %c0_i32_0 = arith.constant 0 : i32
    %c0_i32_1 = arith.constant 0 : i32
    return %c0_i32, %c0_i32_0 : i32, i32
  }
  func.func @transform_16(%arg0: i32) -> (i32, i32, i32) {
    %c0_i32 = arith.constant 0 : i32
    %c0_i32_0 = arith.constant 0 : i32
    %c0_i32_1 = arith.constant 0 : i32
    %c0_i32_2 = arith.constant 0 : i32
    return %c0_i32, %c0_i32_0, %c0_i32_1 : i32, i32, i32
  }
  func.func @transform_17(%arg0: i32) -> (i32, i32, i32) {
    %c0_i32 = arith.constant 0 : i32
    %c0_i32_0 = arith.constant 0 : i32
    %c0_i32_1 = arith.constant 0 : i32
    %c0_i32_2 = arith.constant 0 : i32
    return %c0_i32, %c0_i32_0, %c0_i32_1 : i32, i32, i32
  }
  func.func @transform_18(%arg0: i32) -> (i32, i32) {
    %c0_i32 = arith.constant 0 : i32
    %c0_i32_0 = arith.constant 0 : i32
    %c0_i32_1 = arith.constant 0 : i32
    return %c0_i32, %c0_i32_0 : i32, i32
  }
  func.func @transform_19(%arg0: i32) -> (i32, i32) {
    %c0_i32 = arith.constant 0 : i32
    %c0_i32_0 = arith.constant 0 : i32
    %c0_i32_1 = arith.constant 0 : i32
    return %c0_i32, %c0_i32_0 : i32, i32
  }
  func.func @transform_20(%arg0: i32) -> (i32, i32) {
    %c0_i32 = arith.constant 0 : i32
    %c0_i32_0 = arith.constant 0 : i32
    return %arg0, %c0_i32 : i32, i32
  }
  func.func @transform_21(%arg0: i32) -> (i32, i32) {
    %c0_i32 = arith.constant 0 : i32
    %c0_i32_0 = arith.constant 0 : i32
    return %arg0, %c0_i32 : i32, i32
  }
  func.func @transform_22(%arg0: i32) -> (i32, i32) {
    %c0_i32 = arith.constant 0 : i32
    %c0_i32_0 = arith.constant 0 : i32
    return %arg0, %c0_i32 : i32, i32
  }
}

</mosaic_0001>

<llo_original>
// kernel: affine_halves_forward.1
$region0: #{affine_halves_forward.1}
  #allocation0 [shape = 'u32[]', space=smem, size = 0x4, offset = 0x4, fixed_abs, tag = 'smem constant byte address 0x4 - core index']
  #allocation1 [shape = 'u32[144,128]{1,0:T(1,128)}', space=vmem, size = 0x12000, scoped, tag = 'internal scratch']
  %s0 = inlined_call_operand.vmem [shape: f32[8,128], index: 0, kind: input, shape index: {}]
  %s1 = inlined_call_operand.vmem [shape: f32[8,128], index: 1, kind: input, shape index: {}]
  %s2 = inlined_call_operand.vmem [shape: f32[128,128], index: 2, kind: input, shape index: {}]
  %s3 = inlined_call_operand.vmem [shape: f32[1,128], index: 3, kind: input, shape index: {}]
  %s4 = inlined_call_operand.vmem [shape: f32[2,128,128], index: 4, kind: input, shape index: {}]
  %s5 = inlined_call_operand.vmem [shape: f32[2,1,128], index: 5, kind: input, shape index: {}]
  %s6 = inlined_call_operand.vmem [shape: f32[128,128], index: 6, kind: input, shape index: {}]
  %s7 = inlined_call_operand.vmem [shape: f32[1,128], index: 7, kind: input, shape index: {}]
  %s8 = inlined_call_operand.vmem [shape: f32[128,128], index: 8, kind: input, shape index: {}]
  %s9 = inlined_call_operand.vmem [shape: f32[1,128], index: 9, kind: input, shape index: {}]
  %s10 = inlined_call_operand.vmem [shape: f32[2,128,128], index: 10, kind: input, shape index: {}]
  %s11 = inlined_call_operand.vmem [shape: f32[2,1,128], index: 11, kind: input, shape index: {}]
  %s12 = inlined_call_operand.vmem [shape: f32[128,128], index: 12, kind: input, shape index: {}]
  %s13 = inlined_call_operand.vmem [shape: f32[1,128], index: 13, kind: input, shape index: {}]
  %s14 = inlined_call_operand.vmem [shape: f32[128,128], index: 14, kind: input, shape index: {}]
  %s15 = inlined_call_operand.vmem [shape: f32[1,128], index: 15, kind: input, shape index: {}]
  %s16 = inlined_call_operand.vmem [shape: f32[2,128,128], index: 16, kind: input, shape index: {}]
  %s17 = inlined_call_operand.vmem [shape: f32[2,1,128], index: 17, kind: input, shape index: {}]
  %s18 = inlined_call_operand.vmem [shape: f32[128,128], index: 18, kind: input, shape index: {}]
  %s19 = inlined_call_operand.vmem [shape: f32[1,128], index: 19, kind: input, shape index: {}]
  %s20 = inlined_call_operand.vmem [shape: f32[8,128], index: 20, kind: output, shape index: {0}]
  %s21 = inlined_call_operand.vmem [shape: f32[8,128], index: 21, kind: output, shape index: {1}]
  %s22 = inlined_call_operand.vmem [shape: f32[8,1], index: 22, kind: output, shape index: {2}]
  %23 = xla_tuple %s20, %s21, %s22
  %s24 = sld [smem:[#allocation0]]
  $region106: #{affine_halves_forward.1} parent=0
    _
  %s26 = ssub.s32 1, %s24
  %s27 = scalar_select 0, %s26, %s24
  // Predicated region
  $region2: #{affine_halves_forward.1} parent=0 // pred_check
    _
  $region3: #{affine_halves_forward.1} parent=0 // pred_check_branch
    %29 = sbr.rel (0) target = $region5
  $region4: #{affine_halves_forward.1} parent=0 // pred_region
    _
  $region5: #{affine_halves_forward.1} parent=0 // pred_fallthru
    _
  // Predicated region
  $region6: #{affine_halves_forward.1} parent=0 // pred_check
    _
  $region7: #{affine_halves_forward.1} parent=0 // pred_check_branch
    %31 = sbr.rel (0) target = $region9
  $region8: #{affine_halves_forward.1} parent=0 // pred_region
    _
  $region9: #{affine_halves_forward.1} parent=0 // pred_fallthru
    _
  // Predicated region
  $region10: #{affine_halves_forward.1} parent=0 // pred_check
    _
  $region11: #{affine_halves_forward.1} parent=0 // pred_check_branch
    %33 = sbr.rel (0) target = $region13
  $region12: #{affine_halves_forward.1} parent=0 // pred_region
    _
  $region13: #{affine_halves_forward.1} parent=0 // pred_fallthru
    _
  // Predicated region
  $region14: #{affine_halves_forward.1} parent=0 // pred_check
    _
  $region15: #{affine_halves_forward.1} parent=0 // pred_check_branch
    %35 = sbr.rel (0) target = $region17
  $region16: #{affine_halves_forward.1} parent=0 // pred_region
    _
  $region17: #{affine_halves_forward.1} parent=0 // pred_fallthru
    _
  // Predicated region
  $region18: #{affine_halves_forward.1} parent=0 // pred_check
    _
  $region19: #{affine_halves_forward.1} parent=0 // pred_check_branch
    %37 = sbr.rel (0) target = $region21
  $region20: #{affine_halves_forward.1} parent=0 // pred_region
    _
  $region21: #{affine_halves_forward.1} parent=0 // pred_fallthru
    _
  // Predicated region
  $region22: #{affine_halves_forward.1} parent=0 // pred_check
    _
  $region23: #{affine_halves_forward.1} parent=0 // pred_check_branch
    %39 = sbr.rel (0) target = $region25
  $region24: #{affine_halves_forward.1} parent=0 // pred_region
    _
  $region25: #{affine_halves_forward.1} parent=0 // pred_fallthru
    _
  // Predicated region
  $region26: #{affine_halves_forward.1} parent=0 // pred_check
    _
  $region27: #{affine_halves_forward.1} parent=0 // pred_check_branch
    %41 = sbr.rel (0) target = $region29
  $region28: #{affine_halves_forward.1} parent=0 // pred_region
    _
  $region29: #{affine_halves_forward.1} parent=0 // pred_fallthru
    _
  // Predicated region
  $region30: #{affine_halves_forward.1} parent=0 // pred_check
    _
  $region31: #{affine_halves_forward.1} parent=0 // pred_check_branch
    %43 = sbr.rel (0) target = $region33
  $region32: #{affine_halves_forward.1} parent=0 // pred_region
    _
  $region33: #{affine_halves_forward.1} parent=0 // pred_fallthru
    _
  // Predicated region
  $region34: #{affine_halves_forward.1} parent=0 // pred_check
    _
  $region35: #{affine_halves_forward.1} parent=0 // pred_check_branch
    %45 = sbr.rel (0) target = $region37
  $region36: #{affine_halves_forward.1} parent=0 // pred_region
    _
  $region37: #{affine_halves_forward.1} parent=0 // pred_fallthru
    _
  // Predicated region
  $region38: #{affine_halves_forward.1} parent=0 // pred_check
    _
  $region39: #{affine_halves_forward.1} parent=0 // pred_check_branch
    %47 = sbr.rel (0) target = $region41
  $region40: #{affine_halves_forward.1} parent=0 // pred_region
    _
  $region41: #{affine_halves_forward.1} parent=0 // pred_fallthru
    _
  // Predicated region
  $region42: #{affine_halves_forward.1} parent=0 // pred_check
    _
  $region43: #{affine_halves_forward.1} parent=0 // pred_check_branch
    %49 = sbr.rel (0) target = $region45
  $region44: #{affine_halves_forward.1} parent=0 // pred_region
    _
  $region45: #{affine_halves_forward.1} parent=0 // pred_fallthru
    _
  // Predicated region
  $region46: #{affine_halves_forward.1} parent=0 // pred_check
    _
  $region47: #{affine_halves_forward.1} parent=0 // pred_check_branch
    %51 = sbr.rel (0) target = $region49
  $region48: #{affine_halves_forward.1} parent=0 // pred_region
    _
  $region49: #{affine_halves_forward.1} parent=0 // pred_fallthru
    _
  // Predicated region
  $region50: #{affine_halves_forward.1} parent=0 // pred_check
    _
  $region51: #{affine_halves_forward.1} parent=0 // pred_check_branch
    %53 = sbr.rel (0) target = $region53
  $region52: #{affine_halves_forward.1} parent=0 // pred_region
    _
  $region53: #{affine_halves_forward.1} parent=0 // pred_fallthru
    _
  // Predicated region
  $region54: #{affine_halves_forward.1} parent=0 // pred_check
    _
  $region55: #{affine_halves_forward.1} parent=0 // pred_check_branch
    %55 = sbr.rel (0) target = $region57
  $region56: #{affine_halves_forward.1} parent=0 // pred_region
    _
  $region57: #{affine_halves_forward.1} parent=0 // pred_fallthru
    _
  // Predicated region
  $region58: #{affine_halves_forward.1} parent=0 // pred_check
    _
  $region59: #{affine_halves_forward.1} parent=0 // pred_check_branch
    %57 = sbr.rel (0) target = $region61
  $region60: #{affine_halves_forward.1} parent=0 // pred_region
    _
  $region61: #{affine_halves_forward.1} parent=0 // pred_fallthru
    _
  // Predicated region
  $region62: #{affine_halves_forward.1} parent=0 // pred_check
    _
  $region63: #{affine_halves_forward.1} parent=0 // pred_check_branch
    %59 = sbr.rel (0) target = $region65
  $region64: #{affine_halves_forward.1} parent=0 // pred_region
    _
  $region65: #{affine_halves_forward.1} parent=0 // pred_fallthru
    _
  // Predicated region
  $region66: #{affine_halves_forward.1} parent=0 // pred_check
    _
  $region67: #{affine_halves_forward.1} parent=0 // pred_check_branch
    %61 = sbr.rel (0) target = $region69
  $region68: #{affine_halves_forward.1} parent=0 // pred_region
    _
  $region69: #{affine_halves_forward.1} parent=0 // pred_fallthru
    _
  // Predicated region
  $region70: #{affine_halves_forward.1} parent=0 // pred_check
    _
  $region71: #{affine_halves_forward.1} parent=0 // pred_check_branch
    %63 = sbr.rel (0) target = $region73
  $region72: #{affine_halves_forward.1} parent=0 // pred_region
    _
  $region73: #{affine_halves_forward.1} parent=0 // pred_fallthru
    _
  // Predicated region
  $region74: #{affine_halves_forward.1} parent=0 // pred_check
    _
  $region75: #{affine_halves_forward.1} parent=0 // pred_check_branch
    %65 = sbr.rel (0) target = $region77
  $region76: #{affine_halves_forward.1} parent=0 // pred_region
    _
  $region77: #{affine_halves_forward.1} parent=0 // pred_fallthru
    _
  // Predicated region
  $region78: #{affine_halves_forward.1} parent=0 // pred_check
    _
  $region79: #{affine_halves_forward.1} parent=0 // pred_check_branch
    %67 = sbr.rel (0) target = $region81
  $region80: #{affine_halves_forward.1} parent=0 // pred_region
    _
  $region81: #{affine_halves_forward.1} parent=0 // pred_fallthru
    _
  %v68 = vld [vmem:[%s0] sm:$0xff]
  %v69 = vld [vmem:[%s1] sm:$0xff]
  %v70 = vld [vmem:[%s2] sm:$0xff]
  %v71 = vld [vmem:[%s2 + $0x8] sm:$0xff]
  %v72 = vld [vmem:[%s2 + $0x10] sm:$0xff]
  %v73 = vld [vmem:[%s2 + $0x18] sm:$0xff]
  %v74 = vld [vmem:[%s2 + $0x20] sm:$0xff]
  %v75 = vld [vmem:[%s2 + $0x28] sm:$0xff]
  %v76 = vld [vmem:[%s2 + $0x30] sm:$0xff]
  %v77 = vld [vmem:[%s2 + $0x38] sm:$0xff]
  %v78 = vld [vmem:[%s2 + $0x40] sm:$0xff]
  %v79 = vld [vmem:[%s2 + $0x48] sm:$0xff]
  %v80 = vld [vmem:[%s2 + $0x50] sm:$0xff]
  %v81 = vld [vmem:[%s2 + $0x58] sm:$0xff]
  %v82 = vld [vmem:[%s2 + $0x60] sm:$0xff]
  %v83 = vld [vmem:[%s2 + $0x68] sm:$0xff]
  %v84 = vld [vmem:[%s2 + $0x70] sm:$0xff]
  %v85 = vld [vmem:[%s2 + $0x78] sm:$0xff]
  %v86 = vld [vmem:[%s3] sm:$0x1]
  %v88 = vlaneseq
  %v89 = vshrl.u32 %v88, 7
  %v90 = vsub.s32 0, %v89
  %v91 = vrot.slane %v86, %v90
  %93 = vmatprep.subr.mxu0 0.0
  %94 = vmatpush1.msra.mxu0 %v70
  %95 = vmatprep.subr.mxu0 0.0
  %96 = vmatpush1.msra.mxu0 %v71
  %97 = vmatprep.subr.mxu0 0.0
  %98 = vmatpush1.msra.mxu0 %v72
  %99 = vmatprep.subr.mxu0 0.0
  %100 = vmatpush1.msra.mxu0 %v73
  %101 = vmatprep.subr.mxu0 0.0
  %102 = vmatpush1.msra.mxu0 %v74
  %103 = vmatprep.subr.mxu0 0.0
  %104 = vmatpush1.msra.mxu0 %v75
  %105 = vmatprep.subr.mxu0 0.0
  %106 = vmatpush1.msra.mxu0 %v76
  %107 = vmatprep.subr.mxu0 0.0
  %108 = vmatpush1.msra.mxu0 %v77
  %109 = vmatprep.subr.mxu0 0.0
  %110 = vmatpush1.msra.mxu0 %v78
  %111 = vmatprep.subr.mxu0 0.0
  %112 = vmatpush1.msra.mxu0 %v79
  %113 = vmatprep.subr.mxu0 0.0
  %114 = vmatpush1.msra.mxu0 %v80
  %115 = vmatprep.subr.mxu0 0.0
  %116 = vmatpush1.msra.mxu0 %v81
  %117 = vmatprep.subr.mxu0 0.0
  %118 = vmatpush1.msra.mxu0 %v82
  %119 = vmatprep.subr.mxu0 0.0
  %120 = vmatpush1.msra.mxu0 %v83
  %121 = vmatprep.subr.mxu0 0.0
  %122 = vmatpush1.msra.mxu0 %v84
  %123 = vmatprep.subr.mxu0 0.0
  %124 = vmatpush1.msra.mxu0 %v85
  %125 = vmatprep.subr.mxu0 0.0
  %126 = vmatpush1.msra.mxu0 0.0
  %127 = vmatprep.subr.mxu0 0.0
  %128 = vmatpush1.msra.mxu0 0.0
  %129 = vmatprep.subr.mxu0 0.0
  %130 = vmatpush1.msra.mxu0 0.0
  %131 = vmatprep.subr.mxu0 0.0
  %132 = vmatpush1.msra.mxu0 0.0
  %133 = vmatprep.subr.mxu0 0.0
  %134 = vmatpush1.msra.mxu0 0.0
  %135 = vmatprep.subr.mxu0 0.0
  %136 = vmatpush1.msra.mxu0 0.0
  %137 = vmatprep.subr.mxu0 0.0
  %138 = vmatpush1.msra.mxu0 0.0
  %139 = vmatprep.subr.mxu0 0.0
  %140 = vmatpush1.msra.mxu0 0.0
  %141 = vmatprep.subr.mxu0 0.0
  %142 = vmatpush1.msra.mxu0 0.0
  %143 = vmatprep.subr.mxu0 0.0
  %144 = vmatpush1.msra.mxu0 0.0
  %145 = vmatprep.subr.mxu0 0.0
  %146 = vmatpush1.msra.mxu0 0.0
  %147 = vmatprep.subr.mxu0 0.0
  %148 = vmatpush1.msra.mxu0 0.0
  %149 = vmatprep.subr.mxu0 0.0
  %150 = vmatpush1.msra.mxu0 0.0
  %151 = vmatprep.subr.mxu0 0.0
  %152 = vmatpush1.msra.mxu0 0.0
  %153 = vmatprep.subr.mxu0 0.0
  %154 = vmatpush1.msra.mxu0 0.0
  %155 = vmatprep.subr.mxu0 0.0
  %156 = vmatpush1.msra.mxu0 0.0
  %157 = vmatprep.mubr.f32.mxu0 0.0
  %158 = vmatmul.mubr.f32.gmra.mrb[0].mxu0 %v68
  %v159 = vpop.f32.mrb[0].mxu0
  %v160 = vadd.f32 %v91, %v159
  %v161 = vpop.f32.mrb[0].mxu0
  %162 = vdwg.mxu0
  %v163 = vmax.f32 %v160, 0.0
  %v164 = vld [vmem:[%s4] sm:$0xff]
  %v165 = vld [vmem:[%s4 + $0x8] sm:$0xff]
  %v166 = vld [vmem:[%s4 + $0x10] sm:$0xff]
  %v167 = vld [vmem:[%s4 + $0x18] sm:$0xff]
  %v168 = vld [vmem:[%s4 + $0x20] sm:$0xff]
  %v169 = vld [vmem:[%s4 + $0x28] sm:$0xff]
  %v170 = vld [vmem:[%s4 + $0x30] sm:$0xff]
  %v171 = vld [vmem:[%s4 + $0x38] sm:$0xff]
  %v172 = vld [vmem:[%s4 + $0x40] sm:$0xff]
  %v173 = vld [vmem:[%s4 + $0x48] sm:$0xff]
  %v174 = vld [vmem:[%s4 + $0x50] sm:$0xff]
  %v175 = vld [vmem:[%s4 + $0x58] sm:$0xff]
  %v176 = vld [vmem:[%s4 + $0x60] sm:$0xff]
  %v177 = vld [vmem:[%s4 + $0x68] sm:$0xff]
  %v178 = vld [vmem:[%s4 + $0x70] sm:$0xff]
  %v179 = vld [vmem:[%s4 + $0x78] sm:$0xff]
  %v180 = vld [vmem:[%s5] sm:$0x1]
  %v182 = vlaneseq
  %v183 = vshrl.u32 %v182, 7
  %v184 = vsub.s32 0, %v183
  %v185 = vrot.slane %v180, %v184
  %187 = vmatprep.subr.mxu0 0.0
  %188 = vmatpush1.msra.mxu0 %v164
  %189 = vmatprep.subr.mxu0 0.0
  %190 = vmatpush1.msra.mxu0 %v165
  %191 = vmatprep.subr.mxu0 0.0
  %192 = vmatpush1.msra.mxu0 %v166
  %193 = vmatprep.subr.mxu0 0.0
  %194 = vmatpush1.msra.mxu0 %v167
  %195 = vmatprep.subr.mxu0 0.0
  %196 = vmatpush1.msra.mxu0 %v168
  %197 = vmatprep.subr.mxu0 0.0
  %198 = vmatpush1.msra.mxu0 %v169
  %199 = vmatprep.subr.mxu0 0.0
  %200 = vmatpush1.msra.mxu0 %v170
  %201 = vmatprep.subr.mxu0 0.0
  %202 = vmatpush1.msra.mxu0 %v171
  %203 = vmatprep.subr.mxu0 0.0
  %204 = vmatpush1.msra.mxu0 %v172
  %205 = vmatprep.subr.mxu0 0.0
  %206 = vmatpush1.msra.mxu0 %v173
  %207 = vmatprep.subr.mxu0 0.0
  %208 = vmatpush1.msra.mxu0 %v174
  %209 = vmatprep.subr.mxu0 0.0
  %210 = vmatpush1.msra.mxu0 %v175
  %211 = vmatprep.subr.mxu0 0.0
  %212 = vmatpush1.msra.mxu0 %v176
  %213 = vmatprep.subr.mxu0 0.0
  %214 = vmatpush1.msra.mxu0 %v177
  %215 = vmatprep.subr.mxu0 0.0
  %216 = vmatpush1.msra.mxu0 %v178
  %217 = vmatprep.subr.mxu0 0.0
  %218 = vmatpush1.msra.mxu0 %v179
  %219 = vmatprep.subr.mxu0 0.0
  %220 = vmatpush1.msra.mxu0 0.0
  %221 = vmatprep.subr.mxu0 0.0
  %222 = vmatpush1.msra.mxu0 0.0
  %223 = vmatprep.subr.mxu0 0.0
  %224 = vmatpush1.msra.mxu0 0.0
  %225 = vmatprep.subr.mxu0 0.0
  %226 = vmatpush1.msra.mxu0 0.0
  %227 = vmatprep.subr.mxu0 0.0
  %228 = vmatpush1.msra.mxu0 0.0
  %229 = vmatprep.subr.mxu0 0.0
  %230 = vmatpush1.msra.mxu0 0.0
  %231 = vmatprep.subr.mxu0 0.0
  %232 = vmatpush1.msra.mxu0 0.0
  %233 = vmatprep.subr.mxu0 0.0
  %234 = vmatpush1.msra.mxu0 0.0
  %235 = vmatprep.subr.mxu0 0.0
  %236 = vmatpush1.msra.mxu0 0.0
  %237 = vmatprep.subr.mxu0 0.0
  %238 = vmatpush1.msra.mxu0 0.0
  %239 = vmatprep.subr.mxu0 0.0
  %240 = vmatpush1.msra.mxu0 0.0
  %241 = vmatprep.subr.mxu0 0.0
  %242 = vmatpush1.msra.mxu0 0.0
  %243 = vmatprep.subr.mxu0 0.0
  %244 = vmatpush1.msra.mxu0 0.0
  %245 = vmatprep.subr.mxu0 0.0
  %246 = vmatpush1.msra.mxu0 0.0
  %247 = vmatprep.subr.mxu0 0.0
  %248 = vmatpush1.msra.mxu0 0.0
  %249 = vmatprep.subr.mxu0 0.0
  %250 = vmatpush1.msra.mxu0 0.0
  %251 = vmatprep.mubr.f32.mxu0 0.0
  %252 = vmatmul.mubr.f32.gmra.mrb[0].mxu0 %v163
  %v253 = vpop.f32.mrb[0].mxu0
  %v254 = vadd.f32 %v185, %v253
  %v255 = vpop.f32.mrb[0].mxu0
  %256 = vdwg.mxu0
  %v257 = vmax.f32 %v254, 0.0
  %s258 = scalar_lea.vmem %s4, 128
  %v259 = vld [vmem:[%s258] sm:$0xff]
  %v260 = vld [vmem:[%s258 + $0x8] sm:$0xff]
  %v261 = vld [vmem:[%s258 + $0x10] sm:$0xff]
  %v262 = vld [vmem:[%s258 + $0x18] sm:$0xff]
  %v263 = vld [vmem:[%s258 + $0x20] sm:$0xff]
  %v264 = vld [vmem:[%s258 + $0x28] sm:$0xff]
  %v265 = vld [vmem:[%s258 + $0x30] sm:$0xff]
  %v266 = vld [vmem:[%s258 + $0x38] sm:$0xff]
  %v267 = vld [vmem:[%s258 + $0x40] sm:$0xff]
  %v268 = vld [vmem:[%s258 + $0x48] sm:$0xff]
  %v269 = vld [vmem:[%s258 + $0x50] sm:$0xff]
  %v270 = vld [vmem:[%s258 + $0x58] sm:$0xff]
  %v271 = vld [vmem:[%s258 + $0x60] sm:$0xff]
  %v272 = vld [vmem:[%s258 + $0x68] sm:$0xff]
  %v273 = vld [vmem:[%s258 + $0x70] sm:$0xff]
  %v274 = vld [vmem:[%s258 + $0x78] sm:$0xff]
  %s275 = scalar_lea.vmem %s5, 1
  %v276 = vld [vmem:[%s275] sm:$0x1]
  %v278 = vlaneseq
  %v279 = vshrl.u32 %v278, 7
  %v280 = vsub.s32 0, %v279
  %v281 = vrot.slane %v276, %v280
  %283 = vmatprep.subr.mxu0 0.0
  %284 = vmatpush1.msra.mxu0 %v259
  %285 = vmatprep.subr.mxu0 0.0
  %286 = vmatpush1.msra.mxu0 %v260
  %287 = vmatprep.subr.mxu0 0.0
  %288 = vmatpush1.msra.mxu0 %v261
  %289 = vmatprep.subr.mxu0 0.0
  %290 = vmatpush1.msra.mxu0 %v262
  %291 = vmatprep.subr.mxu0 0.0
  %292 = vmatpush1.msra.mxu0 %v263
  %293 = vmatprep.subr.mxu0 0.0
  %294 = vmatpush1.msra.mxu0 %v264
  %295 = vmatprep.subr.mxu0 0.0
  %296 = vmatpush1.msra.mxu0 %v265
  %297 = vmatprep.subr.mxu0 0.0
  %298 = vmatpush1.msra.mxu0 %v266
  %299 = vmatprep.subr.mxu0 0.0
  %300 = vmatpush1.msra.mxu0 %v267
  %301 = vmatprep.subr.mxu0 0.0
  %302 = vmatpush1.msra.mxu0 %v268
  %303 = vmatprep.subr.mxu0 0.0
  %304 = vmatpush1.msra.mxu0 %v269
  %305 = vmatprep.subr.mxu0 0.0
  %306 = vmatpush1.msra.mxu0 %v270
  %307 = vmatprep.subr.mxu0 0.0
  %308 = vmatpush1.msra.mxu0 %v271
  %309 = vmatprep.subr.mxu0 0.0
  %310 = vmatpush1.msra.mxu0 %v272
  %311 = vmatprep.subr.mxu0 0.0
  %312 = vmatpush1.msra.mxu0 %v273
  %313 = vmatprep.subr.mxu0 0.0
  %314 = vmatpush1.msra.mxu0 %v274
  %315 = vmatprep.subr.mxu0 0.0
  %316 = vmatpush1.msra.mxu0 0.0
  %317 = vmatprep.subr.mxu0 0.0
  %318 = vmatpush1.msra.mxu0 0.0
  %319 = vmatprep.subr.mxu0 0.0
  %320 = vmatpush1.msra.mxu0 0.0
  %321 = vmatprep.subr.mxu0 0.0
  %322 = vmatpush1.msra.mxu0 0.0
  %323 = vmatprep.subr.mxu0 0.0
  %324 = vmatpush1.msra.mxu0 0.0
  %325 = vmatprep.subr.mxu0 0.0
  %326 = vmatpush1.msra.mxu0 0.0
  %327 = vmatprep.subr.mxu0 0.0
  %328 = vmatpush1.msra.mxu0 0.0
  %329 = vmatprep.subr.mxu0 0.0
  %330 = vmatpush1.msra.mxu0 0.0
  %331 = vmatprep.subr.mxu0 0.0
  %332 = vmatpush1.msra.mxu0 0.0
  %333 = vmatprep.subr.mxu0 0.0
  %334 = vmatpush1.msra.mxu0 0.0
  %335 = vmatprep.subr.mxu0 0.0
  %336 = vmatpush1.msra.mxu0 0.0
  %337 = vmatprep.subr.mxu0 0.0
  %338 = vmatpush1.msra.mxu0 0.0
  %339 = vmatprep.subr.mxu0 0.0
  %340 = vmatpush1.msra.mxu0 0.0
  %341 = vmatprep.subr.mxu0 0.0
  %342 = vmatpush1.msra.mxu0 0.0
  %343 = vmatprep.subr.mxu0 0.0
  %344 = vmatpush1.msra.mxu0 0.0
  %345 = vmatprep.subr.mxu0 0.0
  %346 = vmatpush1.msra.mxu0 0.0
  %347 = vmatprep.mubr.f32.mxu0 0.0
  %348 = vmatmul.mubr.f32.gmra.mrb[0].mxu0 %v257
  %v349 = vpop.f32.mrb[0].mxu0
  %v350 = vadd.f32 %v281, %v349
  %v351 = vpop.f32.mrb[0].mxu0
  %352 = vdwg.mxu0
  %v353 = vmax.f32 %v350, 0.0
  %v354 = vld [vmem:[%s6] sm:$0xff]
  %v355 = vld [vmem:[%s6 + $0x8] sm:$0xff]
  %v356 = vld [vmem:[%s6 + $0x10] sm:$0xff]
  %v357 = vld [vmem:[%s6 + $0x18] sm:$0xff]
  %v358 = vld [vmem:[%s6 + $0x20] sm:$0xff]
  %v359 = vld [vmem:[%s6 + $0x28] sm:$0xff]
  %v360 = vld [vmem:[%s6 + $0x30] sm:$0xff]
  %v361 = vld [vmem:[%s6 + $0x38] sm:$0xff]
  %v362 = vld [vmem:[%s6 + $0x40] sm:$0xff]
  %v363 = vld [vmem:[%s6 + $0x48] sm:$0xff]
  %v364 = vld [vmem:[%s6 + $0x50] sm:$0xff]
  %v365 = vld [vmem:[%s6 + $0x58] sm:$0xff]
  %v366 = vld [vmem:[%s6 + $0x60] sm:$0xff]
  %v367 = vld [vmem:[%s6 + $0x68] sm:$0xff]
  %v368 = vld [vmem:[%s6 + $0x70] sm:$0xff]
  %v369 = vld [vmem:[%s6 + $0x78] sm:$0xff]
  %v370 = vld [vmem:[%s7] sm:$0x1]
  %v372 = vlaneseq
  %v373 = vshrl.u32 %v372, 7
  %v374 = vsub.s32 0, %v373
  %v375 = vrot.slane %v370, %v374
  %377 = vmatprep.subr.mxu0 0.0
  %378 = vmatpush1.msra.mxu0 %v354
  %379 = vmatprep.subr.mxu0 0.0
  %380 = vmatpush1.msra.mxu0 %v355
  %381 = vmatprep.subr.mxu0 0.0
  %382 = vmatpush1.msra.mxu0 %v356
  %383 = vmatprep.subr.mxu0 0.0
  %384 = vmatpush1.msra.mxu0 %v357
  %385 = vmatprep.subr.mxu0 0.0
  %386 = vmatpush1.msra.mxu0 %v358
  %387 = vmatprep.subr.mxu0 0.0
  %388 = vmatpush1.msra.mxu0 %v359
  %389 = vmatprep.subr.mxu0 0.0
  %390 = vmatpush1.msra.mxu0 %v360
  %391 = vmatprep.subr.mxu0 0.0
  %392 = vmatpush1.msra.mxu0 %v361
  %393 = vmatprep.subr.mxu0 0.0
  %394 = vmatpush1.msra.mxu0 %v362
  %395 = vmatprep.subr.mxu0 0.0
  %396 = vmatpush1.msra.mxu0 %v363
  %397 = vmatprep.subr.mxu0 0.0
  %398 = vmatpush1.msra.mxu0 %v364
  %399 = vmatprep.subr.mxu0 0.0
  %400 = vmatpush1.msra.mxu0 %v365
  %401 = vmatprep.subr.mxu0 0.0
  %402 = vmatpush1.msra.mxu0 %v366
  %403 = vmatprep.subr.mxu0 0.0
  %404 = vmatpush1.msra.mxu0 %v367
  %405 = vmatprep.subr.mxu0 0.0
  %406 = vmatpush1.msra.mxu0 %v368
  %407 = vmatprep.subr.mxu0 0.0
  %408 = vmatpush1.msra.mxu0 %v369
  %409 = vmatprep.subr.mxu0 0.0
  %410 = vmatpush1.msra.mxu0 0.0
  %411 = vmatprep.subr.mxu0 0.0
  %412 = vmatpush1.msra.mxu0 0.0
  %413 = vmatprep.subr.mxu0 0.0
  %414 = vmatpush1.msra.mxu0 0.0
  %415 = vmatprep.subr.mxu0 0.0
  %416 = vmatpush1.msra.mxu0 0.0
  %417 = vmatprep.subr.mxu0 0.0
  %418 = vmatpush1.msra.mxu0 0.0
  %419 = vmatprep.subr.mxu0 0.0
  %420 = vmatpush1.msra.mxu0 0.0
  %421 = vmatprep.subr.mxu0 0.0
  %422 = vmatpush1.msra.mxu0 0.0
  %423 = vmatprep.subr.mxu0 0.0
  %424 = vmatpush1.msra.mxu0 0.0
  %425 = vmatprep.subr.mxu0 0.0
  %426 = vmatpush1.msra.mxu0 0.0
  %427 = vmatprep.subr.mxu0 0.0
  %428 = vmatpush1.msra.mxu0 0.0
  %429 = vmatprep.subr.mxu0 0.0
  %430 = vmatpush1.msra.mxu0 0.0
  %431 = vmatprep.subr.mxu0 0.0
  %432 = vmatpush1.msra.mxu0 0.0
  %433 = vmatprep.subr.mxu0 0.0
  %434 = vmatpush1.msra.mxu0 0.0
  %435 = vmatprep.subr.mxu0 0.0
  %436 = vmatpush1.msra.mxu0 0.0
  %437 = vmatprep.subr.mxu0 0.0
  %438 = vmatpush1.msra.mxu0 0.0
  %439 = vmatprep.subr.mxu0 0.0
  %440 = vmatpush1.msra.mxu0 0.0
  %441 = vmatprep.mubr.f32.mxu0 0.0
  %442 = vmatmul.mubr.f32.gmra.mrb[0].mxu0 %v353
  %v443 = vpop.f32.mrb[0].mxu0
  %v444 = vadd.f32 %v375, %v443
  %v445 = vpop.f32.mrb[0].mxu0
  %446 = vdwg.mxu0
  %v447 = vld [vmem:[%s8] sm:$0xff]
  %v448 = vld [vmem:[%s8 + $0x8] sm:$0xff]
  %v449 = vld [vmem:[%s8 + $0x10] sm:$0xff]
  %v450 = vld [vmem:[%s8 + $0x18] sm:$0xff]
  %v451 = vld [vmem:[%s8 + $0x20] sm:$0xff]
  %v452 = vld [vmem:[%s8 + $0x28] sm:$0xff]
  %v453 = vld [vmem:[%s8 + $0x30] sm:$0xff]
  %v454 = vld [vmem:[%s8 + $0x38] sm:$0xff]
  %v455 = vld [vmem:[%s8 + $0x40] sm:$0xff]
  %v456 = vld [vmem:[%s8 + $0x48] sm:$0xff]
  %v457 = vld [vmem:[%s8 + $0x50] sm:$0xff]
  %v458 = vld [vmem:[%s8 + $0x58] sm:$0xff]
  %v459 = vld [vmem:[%s8 + $0x60] sm:$0xff]
  %v460 = vld [vmem:[%s8 + $0x68] sm:$0xff]
  %v461 = vld [vmem:[%s8 + $0x70] sm:$0xff]
  %v462 = vld [vmem:[%s8 + $0x78] sm:$0xff]
  %v463 = vld [vmem:[%s9] sm:$0x1]
  %v465 = vlaneseq
  %v466 = vshrl.u32 %v465, 7
  %v467 = vsub.s32 0, %v466
  %v468 = vrot.slane %v463, %v467
  %470 = vmatprep.subr.mxu0 0.0
  %471 = vmatpush1.msra.mxu0 %v447
  %472 = vmatprep.subr.mxu0 0.0
  %473 = vmatpush1.msra.mxu0 %v448
  %474 = vmatprep.subr.mxu0 0.0
  %475 = vmatpush1.msra.mxu0 %v449
  %476 = vmatprep.subr.mxu0 0.0
  %477 = vmatpush1.msra.mxu0 %v450
  %478 = vmatprep.subr.mxu0 0.0
  %479 = vmatpush1.msra.mxu0 %v451
  %480 = vmatprep.subr.mxu0 0.0
  %481 = vmatpush1.msra.mxu0 %v452
  %482 = vmatprep.subr.mxu0 0.0
  %483 = vmatpush1.msra.mxu0 %v453
  %484 = vmatprep.subr.mxu0 0.0
  %485 = vmatpush1.msra.mxu0 %v454
  %486 = vmatprep.subr.mxu0 0.0
  %487 = vmatpush1.msra.mxu0 %v455
  %488 = vmatprep.subr.mxu0 0.0
  %489 = vmatpush1.msra.mxu0 %v456
  %490 = vmatprep.subr.mxu0 0.0
  %491 = vmatpush1.msra.mxu0 %v457
  %492 = vmatprep.subr.mxu0 0.0
  %493 = vmatpush1.msra.mxu0 %v458
  %494 = vmatprep.subr.mxu0 0.0
  %495 = vmatpush1.msra.mxu0 %v459
  %496 = vmatprep.subr.mxu0 0.0
  %497 = vmatpush1.msra.mxu0 %v460
  %498 = vmatprep.subr.mxu0 0.0
  %499 = vmatpush1.msra.mxu0 %v461
  %500 = vmatprep.subr.mxu0 0.0
  %501 = vmatpush1.msra.mxu0 %v462
  %502 = vmatprep.subr.mxu0 0.0
  %503 = vmatpush1.msra.mxu0 0.0
  %504 = vmatprep.subr.mxu0 0.0
  %505 = vmatpush1.msra.mxu0 0.0
  %506 = vmatprep.subr.mxu0 0.0
  %507 = vmatpush1.msra.mxu0 0.0
  %508 = vmatprep.subr.mxu0 0.0
  %509 = vmatpush1.msra.mxu0 0.0
  %510 = vmatprep.subr.mxu0 0.0
  %511 = vmatpush1.msra.mxu0 0.0
  %512 = vmatprep.subr.mxu0 0.0
  %513 = vmatpush1.msra.mxu0 0.0
  %514 = vmatprep.subr.mxu0 0.0
  %515 = vmatpush1.msra.mxu0 0.0
  %516 = vmatprep.subr.mxu0 0.0
  %517 = vmatpush1.msra.mxu0 0.0
  %518 = vmatprep.subr.mxu0 0.0
  %519 = vmatpush1.msra.mxu0 0.0
  %520 = vmatprep.subr.mxu0 0.0
  %521 = vmatpush1.msra.mxu0 0.0
  %522 = vmatprep.subr.mxu0 0.0
  %523 = vmatpush1.msra.mxu0 0.0
  %524 = vmatprep.subr.mxu0 0.0
  %525 = vmatpush1.msra.mxu0 0.0
  %526 = vmatprep.subr.mxu0 0.0
  %527 = vmatpush1.msra.mxu0 0.0
  %528 = vmatprep.subr.mxu0 0.0
  %529 = vmatpush1.msra.mxu0 0.0
  %530 = vmatprep.subr.mxu0 0.0
  %531 = vmatpush1.msra.mxu0 0.0
  %532 = vmatprep.subr.mxu0 0.0
  %533 = vmatpush1.msra.mxu0 0.0
  %534 = vmatprep.mubr.f32.mxu0 0.0
  %535 = vmatmul.mubr.f32.gmra.mrb[0].mxu0 %v68
  %v536 = vpop.f32.mrb[0].mxu0
  %v537 = vadd.f32 %v468, %v536
  %v538 = vpop.f32.mrb[0].mxu0
  %539 = vdwg.mxu0
  %v540 = vmax.f32 %v537, 0.0
  %v541 = vld [vmem:[%s10] sm:$0xff]
  %v542 = vld [vmem:[%s10 + $0x8] sm:$0xff]
  %v543 = vld [vmem:[%s10 + $0x10] sm:$0xff]
  %v544 = vld [vmem:[%s10 + $0x18] sm:$0xff]
  %v545 = vld [vmem:[%s10 + $0x20] sm:$0xff]
  %v546 = vld [vmem:[%s10 + $0x28] sm:$0xff]
  %v547 = vld [vmem:[%s10 + $0x30] sm:$0xff]
  %v548 = vld [vmem:[%s10 + $0x38] sm:$0xff]
  %v549 = vld [vmem:[%s10 + $0x40] sm:$0xff]
  %v550 = vld [vmem:[%s10 + $0x48] sm:$0xff]
  %v551 = vld [vmem:[%s10 + $0x50] sm:$0xff]
  %v552 = vld [vmem:[%s10 + $0x58] sm:$0xff]
  %v553 = vld [vmem:[%s10 + $0x60] sm:$0xff]
  %v554 = vld [vmem:[%s10 + $0x68] sm:$0xff]
  %v555 = vld [vmem:[%s10 + $0x70] sm:$0xff]
  %v556 = vld [vmem:[%s10 + $0x78] sm:$0xff]
  %v557 = vld [vmem:[%s11] sm:$0x1]
  %v559 = vlaneseq
  %v560 = vshrl.u32 %v559, 7
  %v561 = vsub.s32 0, %v560
  %v562 = vrot.slane %v557, %v561
  %564 = vmatprep.subr.mxu0 0.0
  %565 = vmatpush1.msra.mxu0 %v541
  %566 = vmatprep.subr.mxu0 0.0
  %567 = vmatpush1.msra.mxu0 %v542
  %568 = vmatprep.subr.mxu0 0.0
  %569 = vmatpush1.msra.mxu0 %v543
  %570 = vmatprep.subr.mxu0 0.0
  %571 = vmatpush1.msra.mxu0 %v544
  %572 = vmatprep.subr.mxu0 0.0
  %573 = vmatpush1.msra.mxu0 %v545
  %574 = vmatprep.subr.mxu0 0.0
  %575 = vmatpush1.msra.mxu0 %v546
  %576 = vmatprep.subr.mxu0 0.0
  %577 = vmatpush1.msra.mxu0 %v547
  %578 = vmatprep.subr.mxu0 0.0
  %579 = vmatpush1.msra.mxu0 %v548
  %580 = vmatprep.subr.mxu0 0.0
  %581 = vmatpush1.msra.mxu0 %v549
  %582 = vmatprep.subr.mxu0 0.0
  %583 = vmatpush1.msra.mxu0 %v550
  %584 = vmatprep.subr.mxu0 0.0
  %585 = vmatpush1.msra.mxu0 %v551
  %586 = vmatprep.subr.mxu0 0.0
  %587 = vmatpush1.msra.mxu0 %v552
  %588 = vmatprep.subr.mxu0 0.0
  %589 = vmatpush1.msra.mxu0 %v553
  %590 = vmatprep.subr.mxu0 0.0
  %591 = vmatpush1.msra.mxu0 %v554
  %592 = vmatprep.subr.mxu0 0.0
  %593 = vmatpush1.msra.mxu0 %v555
  %594 = vmatprep.subr.mxu0 0.0
  %595 = vmatpush1.msra.mxu0 %v556
  %596 = vmatprep.subr.mxu0 0.0
  %597 = vmatpush1.msra.mxu0 0.0
  %598 = vmatprep.subr.mxu0 0.0
  %599 = vmatpush1.msra.mxu0 0.0
  %600 = vmatprep.subr.mxu0 0.0
  %601 = vmatpush1.msra.mxu0 0.0
  %602 = vmatprep.subr.mxu0 0.0
  %603 = vmatpush1.msra.mxu0 0.0
  %604 = vmatprep.subr.mxu0 0.0
  %605 = vmatpush1.msra.mxu0 0.0
  %606 = vmatprep.subr.mxu0 0.0
  %607 = vmatpush1.msra.mxu0 0.0
  %608 = vmatprep.subr.mxu0 0.0
  %609 = vmatpush1.msra.mxu0 0.0
  %610 = vmatprep.subr.mxu0 0.0
  %611 = vmatpush1.msra.mxu0 0.0
  %612 = vmatprep.subr.mxu0 0.0
  %613 = vmatpush1.msra.mxu0 0.0
  %614 = vmatprep.subr.mxu0 0.0
  %615 = vmatpush1.msra.mxu0 0.0
  %616 = vmatprep.subr.mxu0 0.0
  %617 = vmatpush1.msra.mxu0 0.0
  %618 = vmatprep.subr.mxu0 0.0
  %619 = vmatpush1.msra.mxu0 0.0
  %620 = vmatprep.subr.mxu0 0.0
  %621 = vmatpush1.msra.mxu0 0.0
  %622 = vmatprep.subr.mxu0 0.0
  %623 = vmatpush1.msra.mxu0 0.0
  %624 = vmatprep.subr.mxu0 0.0
  %625 = vmatpush1.msra.mxu0 0.0
  %626 = vmatprep.subr.mxu0 0.0
  %627 = vmatpush1.msra.mxu0 0.0
  %628 = vmatprep.mubr.f32.mxu0 0.0
  %629 = vmatmul.mubr.f32.gmra.mrb[0].mxu0 %v540
  %v630 = vpop.f32.mrb[0].mxu0
  %v631 = vadd.f32 %v562, %v630
  %v632 = vpop.f32.mrb[0].mxu0
  %633 = vdwg.mxu0
  %v634 = vmax.f32 %v631, 0.0
  %s635 = scalar_lea.vmem %s10, 128
  %v636 = vld [vmem:[%s635] sm:$0xff]
  %v637 = vld [vmem:[%s635 + $0x8] sm:$0xff]
  %v638 = vld [vmem:[%s635 + $0x10] sm:$0xff]
  %v639 = vld [vmem:[%s635 + $0x18] sm:$0xff]
  %v640 = vld [vmem:[%s635 + $0x20] sm:$0xff]
  %v641 = vld [vmem:[%s635 + $0x28] sm:$0xff]
  %v642 = vld [vmem:[%s635 + $0x30] sm:$0xff]
  %v643 = vld [vmem:[%s635 + $0x38] sm:$0xff]
  %v644 = vld [vmem:[%s635 + $0x40] sm:$0xff]
  %v645 = vld [vmem:[%s635 + $0x48] sm:$0xff]
  %v646 = vld [vmem:[%s635 + $0x50] sm:$0xff]
  %v647 = vld [vmem:[%s635 + $0x58] sm:$0xff]
  %v648 = vld [vmem:[%s635 + $0x60] sm:$0xff]
  %v649 = vld [vmem:[%s635 + $0x68] sm:$0xff]
  %v650 = vld [vmem:[%s635 + $0x70] sm:$0xff]
  %v651 = vld [vmem:[%s635 + $0x78] sm:$0xff]
  %s652 = scalar_lea.vmem %s11, 1
  %v653 = vld [vmem:[%s652] sm:$0x1]
  %v655 = vlaneseq
  %v656 = vshrl.u32 %v655, 7
  %v657 = vsub.s32 0, %v656
  %v658 = vrot.slane %v653, %v657
  %660 = vmatprep.subr.mxu0 0.0
  %661 = vmatpush1.msra.mxu0 %v636
  %662 = vmatprep.subr.mxu0 0.0
  %663 = vmatpush1.msra.mxu0 %v637
  %664 = vmatprep.subr.mxu0 0.0
  %665 = vmatpush1.msra.mxu0 %v638
  %666 = vmatprep.subr.mxu0 0.0
  %667 = vmatpush1.msra.mxu0 %v639
  %668 = vmatprep.subr.mxu0 0.0
  %669 = vmatpush1.msra.mxu0 %v640
  %670 = vmatprep.subr.mxu0 0.0
  %671 = vmatpush1.msra.mxu0 %v641
  %672 = vmatprep.subr.mxu0 0.0
  %673 = vmatpush1.msra.mxu0 %v642
  %674 = vmatprep.subr.mxu0 0.0
  %675 = vmatpush1.msra.mxu0 %v643
  %676 = vmatprep.subr.mxu0 0.0
  %677 = vmatpush1.msra.mxu0 %v644
  %678 = vmatprep.subr.mxu0 0.0
  %679 = vmatpush1.msra.mxu0 %v645
  %680 = vmatprep.subr.mxu0 0.0
  %681 = vmatpush1.msra.mxu0 %v646
  %682 = vmatprep.subr.mxu0 0.0
  %683 = vmatpush1.msra.mxu0 %v647
  %684 = vmatprep.subr.mxu0 0.0
  %685 = vmatpush1.msra.mxu0 %v648
  %686 = vmatprep.subr.mxu0 0.0
  %687 = vmatpush1.msra.mxu0 %v649
  %688 = vmatprep.subr.mxu0 0.0
  %689 = vmatpush1.msra.mxu0 %v650
  %690 = vmatprep.subr.mxu0 0.0
  %691 = vmatpush1.msra.mxu0 %v651
  %692 = vmatprep.subr.mxu0 0.0
  %693 = vmatpush1.msra.mxu0 0.0
  %694 = vmatprep.subr.mxu0 0.0
  %695 = vmatpush1.msra.mxu0 0.0
  %696 = vmatprep.subr.mxu0 0.0
  %697 = vmatpush1.msra.mxu0 0.0
  %698 = vmatprep.subr.mxu0 0.0
  %699 = vmatpush1.msra.mxu0 0.0
  %700 = vmatprep.subr.mxu0 0.0
  %701 = vmatpush1.msra.mxu0 0.0
  %702 = vmatprep.subr.mxu0 0.0
  %703 = vmatpush1.msra.mxu0 0.0
  %704 = vmatprep.subr.mxu0 0.0
  %705 = vmatpush1.msra.mxu0 0.0
  %706 = vmatprep.subr.mxu0 0.0
  %707 = vmatpush1.msra.mxu0 0.0
  %708 = vmatprep.subr.mxu0 0.0
  %709 = vmatpush1.msra.mxu0 0.0
  %710 = vmatprep.subr.mxu0 0.0
  %711 = vmatpush1.msra.mxu0 0.0
  %712 = vmatprep.subr.mxu0 0.0
  %713 = vmatpush1.msra.mxu0 0.0
  %714 = vmatprep.subr.mxu0 0.0
  %715 = vmatpush1.msra.mxu0 0.0
  %716 = vmatprep.subr.mxu0 0.0
  %717 = vmatpush1.msra.mxu0 0.0
  %718 = vmatprep.subr.mxu0 0.0
  %719 = vmatpush1.msra.mxu0 0.0
  %720 = vmatprep.subr.mxu0 0.0
  %721 = vmatpush1.msra.mxu0 0.0
  %722 = vmatprep.subr.mxu0 0.0
  %723 = vmatpush1.msra.mxu0 0.0
  %724 = vmatprep.mubr.f32.mxu0 0.0
  %725 = vmatmul.mubr.f32.gmra.mrb[0].mxu0 %v634
  %v726 = vpop.f32.mrb[0].mxu0
  %v727 = vadd.f32 %v658, %v726
  %v728 = vpop.f32.mrb[0].mxu0
  %729 = vdwg.mxu0
  %v730 = vmax.f32 %v727, 0.0
  %v731 = vld [vmem:[%s12] sm:$0xff]
  %v732 = vld [vmem:[%s12 + $0x8] sm:$0xff]
  %v733 = vld [vmem:[%s12 + $0x10] sm:$0xff]
  %v734 = vld [vmem:[%s12 + $0x18] sm:$0xff]
  %v735 = vld [vmem:[%s12 + $0x20] sm:$0xff]
  %v736 = vld [vmem:[%s12 + $0x28] sm:$0xff]
  %v737 = vld [vmem:[%s12 + $0x30] sm:$0xff]
  %v738 = vld [vmem:[%s12 + $0x38] sm:$0xff]
  %v739 = vld [vmem:[%s12 + $0x40] sm:$0xff]
  %v740 = vld [vmem:[%s12 + $0x48] sm:$0xff]
  %v741 = vld [vmem:[%s12 + $0x50] sm:$0xff]
  %v742 = vld [vmem:[%s12 + $0x58] sm:$0xff]
  %v743 = vld [vmem:[%s12 + $0x60] sm:$0xff]
  %v744 = vld [vmem:[%s12 + $0x68] sm:$0xff]
  %v745 = vld [vmem:[%s12 + $0x70] sm:$0xff]
  %v746 = vld [vmem:[%s12 + $0x78] sm:$0xff]
  %v747 = vld [vmem:[%s13] sm:$0x1]
  %v749 = vlaneseq
  %v750 = vshrl.u32 %v749, 7
  %v751 = vsub.s32 0, %v750
  %v752 = vrot.slane %v747, %v751
  %754 = vmatprep.subr.mxu0 0.0
  %755 = vmatpush1.msra.mxu0 %v731
  %756 = vmatprep.subr.mxu0 0.0
  %757 = vmatpush1.msra.mxu0 %v732
  %758 = vmatprep.subr.mxu0 0.0
  %759 = vmatpush1.msra.mxu0 %v733
  %760 = vmatprep.subr.mxu0 0.0
  %761 = vmatpush1.msra.mxu0 %v734
  %762 = vmatprep.subr.mxu0 0.0
  %763 = vmatpush1.msra.mxu0 %v735
  %764 = vmatprep.subr.mxu0 0.0
  %765 = vmatpush1.msra.mxu0 %v736
  %766 = vmatprep.subr.mxu0 0.0
  %767 = vmatpush1.msra.mxu0 %v737
  %768 = vmatprep.subr.mxu0 0.0
  %769 = vmatpush1.msra.mxu0 %v738
  %770 = vmatprep.subr.mxu0 0.0
  %771 = vmatpush1.msra.mxu0 %v739
  %772 = vmatprep.subr.mxu0 0.0
  %773 = vmatpush1.msra.mxu0 %v740
  %774 = vmatprep.subr.mxu0 0.0
  %775 = vmatpush1.msra.mxu0 %v741
  %776 = vmatprep.subr.mxu0 0.0
  %777 = vmatpush1.msra.mxu0 %v742
  %778 = vmatprep.subr.mxu0 0.0
  %779 = vmatpush1.msra.mxu0 %v743
  %780 = vmatprep.subr.mxu0 0.0
  %781 = vmatpush1.msra.mxu0 %v744
  %782 = vmatprep.subr.mxu0 0.0
  %783 = vmatpush1.msra.mxu0 %v745
  %784 = vmatprep.subr.mxu0 0.0
  %785 = vmatpush1.msra.mxu0 %v746
  %786 = vmatprep.subr.mxu0 0.0
  %787 = vmatpush1.msra.mxu0 0.0
  %788 = vmatprep.subr.mxu0 0.0
  %789 = vmatpush1.msra.mxu0 0.0
  %790 = vmatprep.subr.mxu0 0.0
  %791 = vmatpush1.msra.mxu0 0.0
  %792 = vmatprep.subr.mxu0 0.0
  %793 = vmatpush1.msra.mxu0 0.0
  %794 = vmatprep.subr.mxu0 0.0
  %795 = vmatpush1.msra.mxu0 0.0
  %796 = vmatprep.subr.mxu0 0.0
  %797 = vmatpush1.msra.mxu0 0.0
  %798 = vmatprep.subr.mxu0 0.0
  %799 = vmatpush1.msra.mxu0 0.0
  %800 = vmatprep.subr.mxu0 0.0
  %801 = vmatpush1.msra.mxu0 0.0
  %802 = vmatprep.subr.mxu0 0.0
  %803 = vmatpush1.msra.mxu0 0.0
  %804 = vmatprep.subr.mxu0 0.0
  %805 = vmatpush1.msra.mxu0 0.0
  %806 = vmatprep.subr.mxu0 0.0
  %807 = vmatpush1.msra.mxu0 0.0
  %808 = vmatprep.subr.mxu0 0.0
  %809 = vmatpush1.msra.mxu0 0.0
  %810 = vmatprep.subr.mxu0 0.0
  %811 = vmatpush1.msra.mxu0 0.0
  %812 = vmatprep.subr.mxu0 0.0
  %813 = vmatpush1.msra.mxu0 0.0
  %814 = vmatprep.subr.mxu0 0.0
  %815 = vmatpush1.msra.mxu0 0.0
  %816 = vmatprep.subr.mxu0 0.0
  %817 = vmatpush1.msra.mxu0 0.0
  %818 = vmatprep.mubr.f32.mxu0 0.0
  %819 = vmatmul.mubr.f32.gmra.mrb[0].mxu0 %v730
  %v820 = vpop.f32.mrb[0].mxu0
  %v821 = vadd.f32 %v752, %v820
  %v822 = vpop.f32.mrb[0].mxu0
  %823 = vdwg.mxu0
  %v824 = vmul.f32 %v821, 1.442695
  %v825 = vpow.pop %v824
  %v826 = vmul.f32 %v825, %v69
  %v827 = vadd.f32 %v826, %v444
  %v828 = vld [vmem:[%s14] sm:$0xff]
  %v829 = vld [vmem:[%s14 + $0x8] sm:$0xff]
  %v830 = vld [vmem:[%s14 + $0x10] sm:$0xff]
  %v831 = vld [vmem:[%s14 + $0x18] sm:$0xff]
  %v832 = vld [vmem:[%s14 + $0x20] sm:$0xff]
  %v833 = vld [vmem:[%s14 + $0x28] sm:$0xff]
  %v834 = vld [vmem:[%s14 + $0x30] sm:$0xff]
  %v835 = vld [vmem:[%s14 + $0x38] sm:$0xff]
  %v836 = vld [vmem:[%s14 + $0x40] sm:$0xff]
  %v837 = vld [vmem:[%s14 + $0x48] sm:$0xff]
  %v838 = vld [vmem:[%s14 + $0x50] sm:$0xff]
  %v839 = vld [vmem:[%s14 + $0x58] sm:$0xff]
  %v840 = vld [vmem:[%s14 + $0x60] sm:$0xff]
  %v841 = vld [vmem:[%s14 + $0x68] sm:$0xff]
  %v842 = vld [vmem:[%s14 + $0x70] sm:$0xff]
  %v843 = vld [vmem:[%s14 + $0x78] sm:$0xff]
  %v844 = vld [vmem:[%s15] sm:$0x1]
  %v846 = vlaneseq
  %v847 = vshrl.u32 %v846, 7
  %v848 = vsub.s32 0, %v847
  %v849 = vrot.slane %v844, %v848
  %851 = vmatprep.subr.mxu0 0.0
  %852 = vmatpush1.msra.mxu0 %v828
  %853 = vmatprep.subr.mxu0 0.0
  %854 = vmatpush1.msra.mxu0 %v829
  %855 = vmatprep.subr.mxu0 0.0
  %856 = vmatpush1.msra.mxu0 %v830
  %857 = vmatprep.subr.mxu0 0.0
  %858 = vmatpush1.msra.mxu0 %v831
  %859 = vmatprep.subr.mxu0 0.0
  %860 = vmatpush1.msra.mxu0 %v832
  %861 = vmatprep.subr.mxu0 0.0
  %862 = vmatpush1.msra.mxu0 %v833
  %863 = vmatprep.subr.mxu0 0.0
  %864 = vmatpush1.msra.mxu0 %v834
  %865 = vmatprep.subr.mxu0 0.0
  %866 = vmatpush1.msra.mxu0 %v835
  %867 = vmatprep.subr.mxu0 0.0
  %868 = vmatpush1.msra.mxu0 %v836
  %869 = vmatprep.subr.mxu0 0.0
  %870 = vmatpush1.msra.mxu0 %v837
  %871 = vmatprep.subr.mxu0 0.0
  %872 = vmatpush1.msra.mxu0 %v838
  %873 = vmatprep.subr.mxu0 0.0
  %874 = vmatpush1.msra.mxu0 %v839
  %875 = vmatprep.subr.mxu0 0.0
  %876 = vmatpush1.msra.mxu0 %v840
  %877 = vmatprep.subr.mxu0 0.0
  %878 = vmatpush1.msra.mxu0 %v841
  %879 = vmatprep.subr.mxu0 0.0
  %880 = vmatpush1.msra.mxu0 %v842
  %881 = vmatprep.subr.mxu0 0.0
  %882 = vmatpush1.msra.mxu0 %v843
  %883 = vmatprep.subr.mxu0 0.0
  %884 = vmatpush1.msra.mxu0 0.0
  %885 = vmatprep.subr.mxu0 0.0
  %886 = vmatpush1.msra.mxu0 0.0
  %887 = vmatprep.subr.mxu0 0.0
  %888 = vmatpush1.msra.mxu0 0.0
  %889 = vmatprep.subr.mxu0 0.0
  %890 = vmatpush1.msra.mxu0 0.0
  %891 = vmatprep.subr.mxu0 0.0
  %892 = vmatpush1.msra.mxu0 0.0
  %893 = vmatprep.subr.mxu0 0.0
  %894 = vmatpush1.msra.mxu0 0.0
  %895 = vmatprep.subr.mxu0 0.0
  %896 = vmatpush1.msra.mxu0 0.0
  %897 = vmatprep.subr.mxu0 0.0
  %898 = vmatpush1.msra.mxu0 0.0
  %899 = vmatprep.subr.mxu0 0.0
  %900 = vmatpush1.msra.mxu0 0.0
  %901 = vmatprep.subr.mxu0 0.0
  %902 = vmatpush1.msra.mxu0 0.0
  %903 = vmatprep.subr.mxu0 0.0
  %904 = vmatpush1.msra.mxu0 0.0
  %905 = vmatprep.subr.mxu0 0.0
  %906 = vmatpush1.msra.mxu0 0.0
  %907 = vmatprep.subr.mxu0 0.0
  %908 = vmatpush1.msra.mxu0 0.0
  %909 = vmatprep.subr.mxu0 0.0
  %910 = vmatpush1.msra.mxu0 0.0
  %911 = vmatprep.subr.mxu0 0.0
  %912 = vmatpush1.msra.mxu0 0.0
  %913 = vmatprep.subr.mxu0 0.0
  %914 = vmatpush1.msra.mxu0 0.0
  %915 = vmatprep.mubr.f32.mxu0 0.0
  %916 = vmatmul.mubr.f32.gmra.mrb[0].mxu0 %v827
  %v917 = vpop.f32.mrb[0].mxu0
  %v918 = vadd.f32 %v849, %v917
  %v919 = vpop.f32.mrb[0].mxu0
  %920 = vdwg.mxu0
  %v921 = vmax.f32 %v918, 0.0
  %v922 = vld [vmem:[%s16] sm:$0xff]
  %v923 = vld [vmem:[%s16 + $0x8] sm:$0xff]
  %v924 = vld [vmem:[%s16 + $0x10] sm:$0xff]
  %v925 = vld [vmem:[%s16 + $0x18] sm:$0xff]
  %v926 = vld [vmem:[%s16 + $0x20] sm:$0xff]
  %v927 = vld [vmem:[%s16 + $0x28] sm:$0xff]
  %v928 = vld [vmem:[%s16 + $0x30] sm:$0xff]
  %v929 = vld [vmem:[%s16 + $0x38] sm:$0xff]
  %v930 = vld [vmem:[%s16 + $0x40] sm:$0xff]
  %v931 = vld [vmem:[%s16 + $0x48] sm:$0xff]
  %v932 = vld [vmem:[%s16 + $0x50] sm:$0xff]
  %v933 = vld [vmem:[%s16 + $0x58] sm:$0xff]
  %v934 = vld [vmem:[%s16 + $0x60] sm:$0xff]
  %v935 = vld [vmem:[%s16 + $0x68] sm:$0xff]
  %v936 = vld [vmem:[%s16 + $0x70] sm:$0xff]
  %v937 = vld [vmem:[%s16 + $0x78] sm:$0xff]
  %v938 = vld [vmem:[%s17] sm:$0x1]
  %v940 = vlaneseq
  %v941 = vshrl.u32 %v940, 7
  %v942 = vsub.s32 0, %v941
  %v943 = vrot.slane %v938, %v942
  %945 = vmatprep.subr.mxu0 0.0
  %946 = vmatpush1.msra.mxu0 %v922
  %947 = vmatprep.subr.mxu0 0.0
  %948 = vmatpush1.msra.mxu0 %v923
  %949 = vmatprep.subr.mxu0 0.0
  %950 = vmatpush1.msra.mxu0 %v924
  %951 = vmatprep.subr.mxu0 0.0
  %952 = vmatpush1.msra.mxu0 %v925
  %953 = vmatprep.subr.mxu0 0.0
  %954 = vmatpush1.msra.mxu0 %v926
  %955 = vmatprep.subr.mxu0 0.0
  %956 = vmatpush1.msra.mxu0 %v927
  %957 = vmatprep.subr.mxu0 0.0
  %958 = vmatpush1.msra.mxu0 %v928
  %959 = vmatprep.subr.mxu0 0.0
  %960 = vmatpush1.msra.mxu0 %v929
  %961 = vmatprep.subr.mxu0 0.0
  %962 = vmatpush1.msra.mxu0 %v930
  %963 = vmatprep.subr.mxu0 0.0
  %964 = vmatpush1.msra.mxu0 %v931
  %965 = vmatprep.subr.mxu0 0.0
  %966 = vmatpush1.msra.mxu0 %v932
  %967 = vmatprep.subr.mxu0 0.0
  %968 = vmatpush1.msra.mxu0 %v933
  %969 = vmatprep.subr.mxu0 0.0
  %970 = vmatpush1.msra.mxu0 %v934
  %971 = vmatprep.subr.mxu0 0.0
  %972 = vmatpush1.msra.mxu0 %v935
  %973 = vmatprep.subr.mxu0 0.0
  %974 = vmatpush1.msra.mxu0 %v936
  %975 = vmatprep.subr.mxu0 0.0
  %976 = vmatpush1.msra.mxu0 %v937
  %977 = vmatprep.subr.mxu0 0.0
  %978 = vmatpush1.msra.mxu0 0.0
  %979 = vmatprep.subr.mxu0 0.0
  %980 = vmatpush1.msra.mxu0 0.0
  %981 = vmatprep.subr.mxu0 0.0
  %982 = vmatpush1.msra.mxu0 0.0
  %983 = vmatprep.subr.mxu0 0.0
  %984 = vmatpush1.msra.mxu0 0.0
  %985 = vmatprep.subr.mxu0 0.0
  %986 = vmatpush1.msra.mxu0 0.0
  %987 = vmatprep.subr.mxu0 0.0
  %988 = vmatpush1.msra.mxu0 0.0
  %989 = vmatprep.subr.mxu0 0.0
  %990 = vmatpush1.msra.mxu0 0.0
  %991 = vmatprep.subr.mxu0 0.0
  %992 = vmatpush1.msra.mxu0 0.0
  %993 = vmatprep.subr.mxu0 0.0
  %994 = vmatpush1.msra.mxu0 0.0
  %995 = vmatprep.subr.mxu0 0.0
  %996 = vmatpush1.msra.mxu0 0.0
  %997 = vmatprep.subr.mxu0 0.0
  %998 = vmatpush1.msra.mxu0 0.0
  %999 = vmatprep.subr.mxu0 0.0
  %1000 = vmatpush1.msra.mxu0 0.0
  %1001 = vmatprep.subr.mxu0 0.0
  %1002 = vmatpush1.msra.mxu0 0.0
  %1003 = vmatprep.subr.mxu0 0.0
  %1004 = vmatpush1.msra.mxu0 0.0
  %1005 = vmatprep.subr.mxu0 0.0
  %1006 = vmatpush1.msra.mxu0 0.0
  %1007 = vmatprep.subr.mxu0 0.0
  %1008 = vmatpush1.msra.mxu0 0.0
  %1009 = vmatprep.mubr.f32.mxu0 0.0
  %1010 = vmatmul.mubr.f32.gmra.mrb[0].mxu0 %v921
  %v1011 = vpop.f32.mrb[0].mxu0
  %v1012 = vadd.f32 %v943, %v1011
  %v1013 = vpop.f32.mrb[0].mxu0
  %1014 = vdwg.mxu0
  %v1015 = vmax.f32 %v1012, 0.0
  %s1016 = scalar_lea.vmem %s16, 128
  %v1017 = vld [vmem:[%s1016] sm:$0xff]
  %v1018 = vld [vmem:[%s1016 + $0x8] sm:$0xff]
  %v1019 = vld [vmem:[%s1016 + $0x10] sm:$0xff]
  %v1020 = vld [vmem:[%s1016 + $0x18] sm:$0xff]
  %v1021 = vld [vmem:[%s1016 + $0x20] sm:$0xff]
  %v1022 = vld [vmem:[%s1016 + $0x28] sm:$0xff]
  %v1023 = vld [vmem:[%s1016 + $0x30] sm:$0xff]
  %v1024 = vld [vmem:[%s1016 + $0x38] sm:$0xff]
  %v1025 = vld [vmem:[%s1016 + $0x40] sm:$0xff]
  %v1026 = vld [vmem:[%s1016 + $0x48] sm:$0xff]
  %v1027 = vld [vmem:[%s1016 + $0x50] sm:$0xff]
  %v1028 = vld [vmem:[%s1016 + $0x58] sm:$0xff]
  %v1029 = vld [vmem:[%s1016 + $0x60] sm:$0xff]
  %v1030 = vld [vmem:[%s1016 + $0x68] sm:$0xff]
  %v1031 = vld [vmem:[%s1016 + $0x70] sm:$0xff]
  %v1032 = vld [vmem:[%s1016 + $0x78] sm:$0xff]
  %s1033 = scalar_lea.vmem %s17, 1
  %v1034 = vld [vmem:[%s1033] sm:$0x1]
  %v1036 = vlaneseq
  %v1037 = vshrl.u32 %v1036, 7
  %v1038 = vsub.s32 0, %v1037
  %v1039 = vrot.slane %v1034, %v1038
  %1041 = vmatprep.subr.mxu0 0.0
  %1042 = vmatpush1.msra.mxu0 %v1017
  %1043 = vmatprep.subr.mxu0 0.0
  %1044 = vmatpush1.msra.mxu0 %v1018
  %1045 = vmatprep.subr.mxu0 0.0
  %1046 = vmatpush1.msra.mxu0 %v1019
  %1047 = vmatprep.subr.mxu0 0.0
  %1048 = vmatpush1.msra.mxu0 %v1020
  %1049 = vmatprep.subr.mxu0 0.0
  %1050 = vmatpush1.msra.mxu0 %v1021
  %1051 = vmatprep.subr.mxu0 0.0
  %1052 = vmatpush1.msra.mxu0 %v1022
  %1053 = vmatprep.subr.mxu0 0.0
  %1054 = vmatpush1.msra.mxu0 %v1023
  %1055 = vmatprep.subr.mxu0 0.0
  %1056 = vmatpush1.msra.mxu0 %v1024
  %1057 = vmatprep.subr.mxu0 0.0
  %1058 = vmatpush1.msra.mxu0 %v1025
  %1059 = vmatprep.subr.mxu0 0.0
  %1060 = vmatpush1.msra.mxu0 %v1026
  %1061 = vmatprep.subr.mxu0 0.0
  %1062 = vmatpush1.msra.mxu0 %v1027
  %1063 = vmatprep.subr.mxu0 0.0
  %1064 = vmatpush1.msra.mxu0 %v1028
  %1065 = vmatprep.subr.mxu0 0.0
  %1066 = vmatpush1.msra.mxu0 %v1029
  %1067 = vmatprep.subr.mxu0 0.0
  %1068 = vmatpush1.msra.mxu0 %v1030
  %1069 = vmatprep.subr.mxu0 0.0
  %1070 = vmatpush1.msra.mxu0 %v1031
  %1071 = vmatprep.subr.mxu0 0.0
  %1072 = vmatpush1.msra.mxu0 %v1032
  %1073 = vmatprep.subr.mxu0 0.0
  %1074 = vmatpush1.msra.mxu0 0.0
  %1075 = vmatprep.subr.mxu0 0.0
  %1076 = vmatpush1.msra.mxu0 0.0
  %1077 = vmatprep.subr.mxu0 0.0
  %1078 = vmatpush1.msra.mxu0 0.0
  %1079 = vmatprep.subr.mxu0 0.0
  %1080 = vmatpush1.msra.mxu0 0.0
  %1081 = vmatprep.subr.mxu0 0.0
  %1082 = vmatpush1.msra.mxu0 0.0
  %1083 = vmatprep.subr.mxu0 0.0
  %1084 = vmatpush1.msra.mxu0 0.0
  %1085 = vmatprep.subr.mxu0 0.0
  %1086 = vmatpush1.msra.mxu0 0.0
  %1087 = vmatprep.subr.mxu0 0.0
  %1088 = vmatpush1.msra.mxu0 0.0
  %1089 = vmatprep.subr.mxu0 0.0
  %1090 = vmatpush1.msra.mxu0 0.0
  %1091 = vmatprep.subr.mxu0 0.0
  %1092 = vmatpush1.msra.mxu0 0.0
  %1093 = vmatprep.subr.mxu0 0.0
  %1094 = vmatpush1.msra.mxu0 0.0
  %1095 = vmatprep.subr.mxu0 0.0
  %1096 = vmatpush1.msra.mxu0 0.0
  %1097 = vmatprep.subr.mxu0 0.0
  %1098 = vmatpush1.msra.mxu0 0.0
  %1099 = vmatprep.subr.mxu0 0.0
  %1100 = vmatpush1.msra.mxu0 0.0
  %1101 = vmatprep.subr.mxu0 0.0
  %1102 = vmatpush1.msra.mxu0 0.0
  %1103 = vmatprep.subr.mxu0 0.0
  %1104 = vmatpush1.msra.mxu0 0.0
  %1105 = vmatprep.mubr.f32.mxu0 0.0
  %1106 = vmatmul.mubr.f32.gmra.mrb[0].mxu0 %v1015
  %v1107 = vpop.f32.mrb[0].mxu0
  %v1108 = vadd.f32 %v1039, %v1107
  %v1109 = vpop.f32.mrb[0].mxu0
  %1110 = vdwg.mxu0
  %v1111 = vmax.f32 %v1108, 0.0
  %v1112 = vld [vmem:[%s18] sm:$0xff]
  %v1113 = vld [vmem:[%s18 + $0x8] sm:$0xff]
  %v1114 = vld [vmem:[%s18 + $0x10] sm:$0xff]
  %v1115 = vld [vmem:[%s18 + $0x18] sm:$0xff]
  %v1116 = vld [vmem:[%s18 + $0x20] sm:$0xff]
  %v1117 = vld [vmem:[%s18 + $0x28] sm:$0xff]
  %v1118 = vld [vmem:[%s18 + $0x30] sm:$0xff]
  %v1119 = vld [vmem:[%s18 + $0x38] sm:$0xff]
  %v1120 = vld [vmem:[%s18 + $0x40] sm:$0xff]
  %v1121 = vld [vmem:[%s18 + $0x48] sm:$0xff]
  %v1122 = vld [vmem:[%s18 + $0x50] sm:$0xff]
  %v1123 = vld [vmem:[%s18 + $0x58] sm:$0xff]
  %v1124 = vld [vmem:[%s18 + $0x60] sm:$0xff]
  %v1125 = vld [vmem:[%s18 + $0x68] sm:$0xff]
  %v1126 = vld [vmem:[%s18 + $0x70] sm:$0xff]
  %v1127 = vld [vmem:[%s18 + $0x78] sm:$0xff]
  %v1128 = vld [vmem:[%s19] sm:$0x1]
  %v1130 = vlaneseq
  %v1131 = vshrl.u32 %v1130, 7
  %v1132 = vsub.s32 0, %v1131
  %v1133 = vrot.slane %v1128, %v1132
  %1135 = vmatprep.subr.mxu0 0.0
  %1136 = vmatpush1.msra.mxu0 %v1112
  %1137 = vmatprep.subr.mxu0 0.0
  %1138 = vmatpush1.msra.mxu0 %v1113
  %1139 = vmatprep.subr.mxu0 0.0
  %1140 = vmatpush1.msra.mxu0 %v1114
  %1141 = vmatprep.subr.mxu0 0.0
  %1142 = vmatpush1.msra.mxu0 %v1115
  %1143 = vmatprep.subr.mxu0 0.0
  %1144 = vmatpush1.msra.mxu0 %v1116
  %1145 = vmatprep.subr.mxu0 0.0
  %1146 = vmatpush1.msra.mxu0 %v1117
  %1147 = vmatprep.subr.mxu0 0.0
  %1148 = vmatpush1.msra.mxu0 %v1118
  %1149 = vmatprep.subr.mxu0 0.0
  %1150 = vmatpush1.msra.mxu0 %v1119
  %1151 = vmatprep.subr.mxu0 0.0
  %1152 = vmatpush1.msra.mxu0 %v1120
  %1153 = vmatprep.subr.mxu0 0.0
  %1154 = vmatpush1.msra.mxu0 %v1121
  %1155 = vmatprep.subr.mxu0 0.0
  %1156 = vmatpush1.msra.mxu0 %v1122
  %1157 = vmatprep.subr.mxu0 0.0
  %1158 = vmatpush1.msra.mxu0 %v1123
  %1159 = vmatprep.subr.mxu0 0.0
  %1160 = vmatpush1.msra.mxu0 %v1124
  %1161 = vmatprep.subr.mxu0 0.0
  %1162 = vmatpush1.msra.mxu0 %v1125
  %1163 = vmatprep.subr.mxu0 0.0
  %1164 = vmatpush1.msra.mxu0 %v1126
  %1165 = vmatprep.subr.mxu0 0.0
  %1166 = vmatpush1.msra.mxu0 %v1127
  %1167 = vmatprep.subr.mxu0 0.0
  %1168 = vmatpush1.msra.mxu0 0.0
  %1169 = vmatprep.subr.mxu0 0.0
  %1170 = vmatpush1.msra.mxu0 0.0
  %1171 = vmatprep.subr.mxu0 0.0
  %1172 = vmatpush1.msra.mxu0 0.0
  %1173 = vmatprep.subr.mxu0 0.0
  %1174 = vmatpush1.msra.mxu0 0.0
  %1175 = vmatprep.subr.mxu0 0.0
  %1176 = vmatpush1.msra.mxu0 0.0
  %1177 = vmatprep.subr.mxu0 0.0
  %1178 = vmatpush1.msra.mxu0 0.0
  %1179 = vmatprep.subr.mxu0 0.0
  %1180 = vmatpush1.msra.mxu0 0.0
  %1181 = vmatprep.subr.mxu0 0.0
  %1182 = vmatpush1.msra.mxu0 0.0
  %1183 = vmatprep.subr.mxu0 0.0
  %1184 = vmatpush1.msra.mxu0 0.0
  %1185 = vmatprep.subr.mxu0 0.0
  %1186 = vmatpush1.msra.mxu0 0.0
  %1187 = vmatprep.subr.mxu0 0.0
  %1188 = vmatpush1.msra.mxu0 0.0
  %1189 = vmatprep.subr.mxu0 0.0
  %1190 = vmatpush1.msra.mxu0 0.0
  %1191 = vmatprep.subr.mxu0 0.0
  %1192 = vmatpush1.msra.mxu0 0.0
  %1193 = vmatprep.subr.mxu0 0.0
  %1194 = vmatpush1.msra.mxu0 0.0
  %1195 = vmatprep.subr.mxu0 0.0
  %1196 = vmatpush1.msra.mxu0 0.0
  %1197 = vmatprep.subr.mxu0 0.0
  %1198 = vmatpush1.msra.mxu0 0.0
  %1199 = vmatprep.mubr.f32.mxu0 0.0
  %1200 = vmatmul.mubr.f32.gmra.mrb[0].mxu0 %v1111
  %v1201 = vpop.f32.mrb[0].mxu0
  %v1202 = vadd.f32 %v1133, %v1201
  %v1203 = vpop.f32.mrb[0].mxu0
  %1204 = vdwg.mxu0
  %v1205 = vadd.f32 %v68, %v1202
  %1206 = vadd.xlane.f32.xlu0 %v821
  %v1207 = vpop.xlane.xlu0 %1206
  %1208 = vst [vmem:[%s20] sm:$0xff] %v1205
  %1209 = vst [vmem:[%s21] sm:$0xff] %v827
  %vm1210 = vcmask 7168
  %1211 = vst.msk [vmem:[%s22] sm:$0xff] %vm1210, %v1207
  // Predicated region
  $region82: #{affine_halves_forward.1} parent=0 // pred_check
    _
  $region83: #{affine_halves_forward.1} parent=0 // pred_check_branch
    %1213 = sbr.rel (0) target = $region85
  $region84: #{affine_halves_forward.1} parent=0 // pred_region
    _
  $region85: #{affine_halves_forward.1} parent=0 // pred_fallthru
    _
  // Predicated region
  $region86: #{affine_halves_forward.1} parent=0 // pred_check
    _
  $region87: #{affine_halves_forward.1} parent=0 // pred_check_branch
    %1215 = sbr.rel (0) target = $region89
  $region88: #{affine_halves_forward.1} parent=0 // pred_region
    _
  $region89: #{affine_halves_forward.1} parent=0 // pred_fallthru
    _
  // Predicated region
  $region90: #{affine_halves_forward.1} parent=0 // pred_check
    _
  $region91: #{affine_halves_forward.1} parent=0 // pred_check_branch
    %1217 = sbr.rel (0) target = $region93
  $region92: #{affine_halves_forward.1} parent=0 // pred_region
    _
  $region93: #{affine_halves_forward.1} parent=0 // pred_fallthru
    _
  // Predicated region
  $region94: #{affine_halves_forward.1} parent=0 // pred_check
    _
  $region95: #{affine_halves_forward.1} parent=0 // pred_check_branch
    %1219 = sbr.rel (0) target = $region97
  $region96: #{affine_halves_forward.1} parent=0 // pred_region
    _
  $region97: #{affine_halves_forward.1} parent=0 // pred_fallthru
    _
  // Predicated region
  $region98: #{affine_halves_forward.1} parent=0 // pred_check
    _
  $region99: #{affine_halves_forward.1} parent=0 // pred_check_branch
    %1221 = sbr.rel (0) target = $region101
  $region100: #{affine_halves_forward.1} parent=0 // pred_region
    _
  $region101: #{affine_halves_forward.1} parent=0 // pred_fallthru
    _
  // Predicated region
  $region102: #{affine_halves_forward.1} parent=0 // pred_check
    _
  $region103: #{affine_halves_forward.1} parent=0 // pred_check_branch
    %1223 = sbr.rel (0) target = $region105
  $region104: #{affine_halves_forward.1} parent=0 // pred_region
    _
  $region105: #{affine_halves_forward.1} parent=0 // pred_fallthru
    _

</llo_original>
